<compile_context>
chip_gen: v6e
topology: v6e:2x2x1
jax: 0.10.0
libtpu: 0.0.40
codegen_flags: <defaults>
</compile_context>

<pallas_src>
import jax
import jax.numpy as jnp
from jax import lax
from jax.experimental import pallas as pl
from jax.experimental.pallas import tpu as pltpu


def fused_lstm_kernel(x_ref, w_ref, b_ref, wh_ref, bh_ref, out_ref,
                      seq_scr, h_scr, c_scr, xh_scr):
    # x_ref   : (B, S, D)     batch-first input (raw, un-padded)
    # w_ref   : (L, 2H, 4H)   stacked [W_ih^T ; W_hh^T] per layer (layer 0 zero-padded)
    # b_ref   : (L, 1, 4H)    b_ih + b_hh per layer
    # wh_ref  : (1, H)        folded head weight (w_lin[:, :H] + w_lin[:, H:]), O == 1
    # bh_ref  : (1, 1)        head bias
    # out_ref : (B, 1)        final prediction (only HBM write of the kernel)
    # seq_scr : (S, B, H)     inter-layer activation buffer (stays in VMEM)
    # h_scr, c_scr : (B, H)   recurrent state
    # xh_scr  : (B, 2H)       packed [x_t, h_{t-1}] matmul operand
    S, B, H = seq_scr.shape
    D = x_ref.shape[-1]
    L = w_ref.shape[0]
    FOUR_H = 4 * H

    # Stage the input into the time-major, zero-padded sequence buffer (VMEM only).
    seq_scr[...] = jnp.zeros_like(seq_scr)
    for t in range(S):                          # static unroll, S is small
        seq_scr[t, :, 0:D] = x_ref[:, t, :]

    def layer_body(l, carry):
        w_l = w_ref[l]                                         # (2H, 4H)
        b_l = jnp.broadcast_to(b_ref[l], (B, FOUR_H))          # hoisted out of time loop
        h_scr[...] = jnp.zeros_like(h_scr)
        c_scr[...] = jnp.zeros_like(c_scr)

        def time_body(t, carry_t):
            # Pack [x_t, h_{t-1}] so all four gates come from ONE MXU matmul.
            xh_scr[:, 0:H] = seq_scr[t]
            xh_scr[:, H:2 * H] = h_scr[...]
            gates = jnp.dot(xh_scr[...], w_l,
                            preferred_element_type=jnp.float32) + b_l   # (B, 4H)
            # Full 128-lane activations, then cheap lane slices (torch order i,f,g,o).
            sig = jax.nn.sigmoid(gates)
            th = jnp.tanh(gates)
            i_g = sig[:, 0 * H:1 * H]
            f_g = sig[:, 1 * H:2 * H]
            g_g = th[:, 2 * H:3 * H]
            o_g = sig[:, 3 * H:4 * H]
            c_new = f_g * c_scr[...] + i_g * g_g
            h_new = o_g * jnp.tanh(c_new)
            c_scr[...] = c_new
            h_scr[...] = h_new
            seq_scr[t] = h_new        # becomes next layer's input; never leaves VMEM
            return carry_t

        lax.fori_loop(0, S, time_body, 0, unroll=True)
        return carry

    lax.fori_loop(0, L, layer_body, 0)

    # Head: lstm_out[:, -1, :] and hidden[-1] are the same tensor, so the concat +
    # 2H-wide linear folds to a single H-wide dot (mul + lane-sum) + sigmoid.
    h_last = h_scr[...]                                        # (B, H)
    logit = jnp.sum(h_last * wh_ref[...], axis=-1, keepdims=True) + bh_ref[...]
    out_ref[...] = jax.nn.sigmoid(logit)


@jax.jit
def success_predictor_forward(params, input_seq):
    x = input_seq.astype(jnp.float32)                          # (B, S, D) batch-first
    B, S, D = x.shape
    w_stack = params["w_stack"]                                # (L, 2H, 4H)
    b_stack = params["b_stack"]                                # (L, 1, 4H)
    w_head = params["w_head"]                                  # (1, H)
    b_head = params["b_head"]                                  # (1, 1)
    L, two_h, four_h = w_stack.shape
    H = two_h // 2
    O = b_head.shape[-1]

    return pl.pallas_call(
        fused_lstm_kernel,
        out_shape=jax.ShapeDtypeStruct((B, O), jnp.float32),
        in_specs=[
            pl.BlockSpec((B, S, D), lambda: (0, 0, 0)),
            pl.BlockSpec((L, two_h, four_h), lambda: (0, 0, 0)),
            pl.BlockSpec((L, 1, four_h), lambda: (0, 0, 0)),
            pl.BlockSpec((1, H), lambda: (0, 0)),
            pl.BlockSpec((1, O), lambda: (0, 0)),
        ],
        out_specs=pl.BlockSpec((B, O), lambda: (0, 0)),
        scratch_shapes=[
            pltpu.VMEM((S, B, H), jnp.float32),    # inter-layer sequence buffer
            pltpu.VMEM((B, H), jnp.float32),       # h
            pltpu.VMEM((B, H), jnp.float32),       # c
            pltpu.VMEM((B, 2 * H), jnp.float32),   # packed [x_t, h]
        ],
    )(x, w_stack, b_stack, w_head, b_head)


# ---------------------------------------------------------------------------
# Parameter construction (deterministic, PyTorch-style uniform init), with the
# weight stacking / padding / head folding done once at init time.
# ---------------------------------------------------------------------------
def init_params(key, input_size, hidden_size, num_layers, output_size):
    H = hidden_size
    bound = 1.0 / jnp.sqrt(H)
    w_list, b_list = [], []
    for layer in range(num_layers):
        d_in = input_size if layer == 0 else H
        key, k1, k2, k3, k4 = jax.random.split(key, 5)
        w_ih = jax.random.uniform(k1, (4 * H, d_in), jnp.float32, -bound, bound)
        w_hh = jax.random.uniform(k2, (4 * H, H), jnp.float32, -bound, bound)
        b_ih = jax.random.uniform(k3, (4 * H,), jnp.float32, -bound, bound)
        b_hh = jax.random.uniform(k4, (4 * H,), jnp.float32, -bound, bound)
        w_ih_t = w_ih.T                                        # (d_in, 4H)
        if d_in < H:  # zero-pad layer-0 input rows so every layer shares (2H, 4H)
            w_ih_t = jnp.pad(w_ih_t, ((0, H - d_in), (0, 0)))
        w_list.append(jnp.concatenate([w_ih_t, w_hh.T], axis=0))   # (2H, 4H)
        b_list.append((b_ih + b_hh).reshape(1, 4 * H))             # (1, 4H)

    key, k5, k6 = jax.random.split(key, 3)
    lin_bound = 1.0 / jnp.sqrt(2 * H)
    w_lin = jax.random.uniform(k5, (output_size, 2 * H), jnp.float32,
                               -lin_bound, lin_bound)
    b_lin = jax.random.uniform(k6, (output_size,), jnp.float32,
                               -lin_bound, lin_bound)
    # lstm_out[:, -1, :] == hidden[-1]  =>  fold the 2H head weight to H exactly.
    w_head = w_lin[:, :H] + w_lin[:, H:]                        # (O, H), O == 1

    return {
        "w_stack": jnp.stack(w_list),                           # (L, 2H, 4H)
        "b_stack": jnp.stack(b_list),                           # (L, 1, 4H)
        "w_head": w_head,                                       # (1, H)
        "b_head": b_lin.reshape(1, -1),                         # (1, 1)
    }


if __name__ == "__main__":
    INPUT_SIZE = 14
    HIDDEN = 32
    NUM_LAYERS = 6
    OUTPUT = 1
    BATCH = 2
    SEQ = 8

    key = jax.random.PRNGKey(0)
    key, pkey, xkey = jax.random.split(key, 3)
    params = init_params(pkey, INPUT_SIZE, HIDDEN, NUM_LAYERS, OUTPUT)
    x = jax.random.normal(xkey, (BATCH, SEQ, INPUT_SIZE), jnp.float32)

    out = success_predictor_forward(params, x)
    jax.block_until_ready(out)
    assert out.shape == (BATCH, OUTPUT)
    print("KERNEL_OK")
</pallas_src>

<mosaic_0001>
module attributes {stable_mosaic.version = 11 : i64} {
  func.func @fused_lstm_kernel(%arg0: memref<2x8x14xf32, #tpu.memory_space<vmem>>, %arg1: memref<6x64x128xf32, #tpu.memory_space<vmem>>, %arg2: memref<6x1x128xf32, #tpu.memory_space<vmem>>, %arg3: memref<1x32xf32, #tpu.memory_space<vmem>>, %arg4: memref<1x1xf32, #tpu.memory_space<vmem>>, %arg5: memref<2x1xf32, #tpu.memory_space<vmem>>, %arg6: memref<8x2x32xf32, #tpu.memory_space<vmem>>, %arg7: memref<2x32xf32, #tpu.memory_space<vmem>>, %arg8: memref<2x32xf32, #tpu.memory_space<vmem>>, %arg9: memref<2x64xf32, #tpu.memory_space<vmem>>) attributes {dimension_semantics = [], scalar_prefetch = 0 : i64, scratch_operands = 4 : i64, tpu.core_type = #tpu.core_type<tc>} {
    %cst = arith.constant 0.000000e+00 : f32
    %0 = vector.broadcast %cst : f32 to vector<8x2x32xf32>
    %c0 = arith.constant 0 : index
    %c0_0 = arith.constant 0 : index
    %c0_1 = arith.constant 0 : index
    %1 = vector.load %arg6[%c0, %c0_0, %c0_1] : memref<8x2x32xf32, #tpu.memory_space<vmem>>, vector<8x2x32xf32>
    tpu.vector_store %arg6[%c0, %c0_0, %c0_1], %0 {strides = array<i32>} : memref<8x2x32xf32, #tpu.memory_space<vmem>>, vector<8x2x32xf32>,
    %c0_2 = arith.constant 0 : index
    %c0_3 = arith.constant 0 : index
    %c0_4 = arith.constant 0 : index
    %2 = vector.load %arg0[%c0_2, %c0_3, %c0_4] : memref<2x8x14xf32, #tpu.memory_space<vmem>>, vector<2x1x14xf32>
    %3 = vector.shape_cast %2 : vector<2x1x14xf32> to vector<2x14xf32>
    %c0_5 = arith.constant 0 : index
    %c0_6 = arith.constant 0 : index
    %c0_7 = arith.constant 0 : index
    %4 = vector.load %arg6[%c0_5, %c0_6, %c0_7] : memref<8x2x32xf32, #tpu.memory_space<vmem>>, vector<1x2x14xf32>
    %5 = vector.shape_cast %4 : vector<1x2x14xf32> to vector<2x14xf32>
    %6 = vector.shape_cast %3 : vector<2x14xf32> to vector<1x2x14xf32>
    tpu.vector_store %arg6[%c0_5, %c0_6, %c0_7], %6 {strides = array<i32>} : memref<8x2x32xf32, #tpu.memory_space<vmem>>, vector<1x2x14xf32>,
    %c0_8 = arith.constant 0 : index
    %c1 = arith.constant 1 : index
    %c0_9 = arith.constant 0 : index
    %7 = vector.load %arg0[%c0_8, %c1, %c0_9] : memref<2x8x14xf32, #tpu.memory_space<vmem>>, vector<2x1x14xf32>
    %8 = vector.shape_cast %7 : vector<2x1x14xf32> to vector<2x14xf32>
    %c1_10 = arith.constant 1 : index
    %c0_11 = arith.constant 0 : index
    %c0_12 = arith.constant 0 : index
    %9 = vector.load %arg6[%c1_10, %c0_11, %c0_12] : memref<8x2x32xf32, #tpu.memory_space<vmem>>, vector<1x2x14xf32>
    %10 = vector.shape_cast %9 : vector<1x2x14xf32> to vector<2x14xf32>
    %11 = vector.shape_cast %8 : vector<2x14xf32> to vector<1x2x14xf32>
    tpu.vector_store %arg6[%c1_10, %c0_11, %c0_12], %11 {strides = array<i32>} : memref<8x2x32xf32, #tpu.memory_space<vmem>>, vector<1x2x14xf32>,
    %c0_13 = arith.constant 0 : index
    %c2 = arith.constant 2 : index
    %c0_14 = arith.constant 0 : index
    %12 = vector.load %arg0[%c0_13, %c2, %c0_14] : memref<2x8x14xf32, #tpu.memory_space<vmem>>, vector<2x1x14xf32>
    %13 = vector.shape_cast %12 : vector<2x1x14xf32> to vector<2x14xf32>
    %c2_15 = arith.constant 2 : index
    %c0_16 = arith.constant 0 : index
    %c0_17 = arith.constant 0 : index
    %14 = vector.load %arg6[%c2_15, %c0_16, %c0_17] : memref<8x2x32xf32, #tpu.memory_space<vmem>>, vector<1x2x14xf32>
    %15 = vector.shape_cast %14 : vector<1x2x14xf32> to vector<2x14xf32>
    %16 = vector.shape_cast %13 : vector<2x14xf32> to vector<1x2x14xf32>
    tpu.vector_store %arg6[%c2_15, %c0_16, %c0_17], %16 {strides = array<i32>} : memref<8x2x32xf32, #tpu.memory_space<vmem>>, vector<1x2x14xf32>,
    %c0_18 = arith.constant 0 : index
    %c3 = arith.constant 3 : index
    %c0_19 = arith.constant 0 : index
    %17 = vector.load %arg0[%c0_18, %c3, %c0_19] : memref<2x8x14xf32, #tpu.memory_space<vmem>>, vector<2x1x14xf32>
    %18 = vector.shape_cast %17 : vector<2x1x14xf32> to vector<2x14xf32>
    %c3_20 = arith.constant 3 : index
    %c0_21 = arith.constant 0 : index
    %c0_22 = arith.constant 0 : index
    %19 = vector.load %arg6[%c3_20, %c0_21, %c0_22] : memref<8x2x32xf32, #tpu.memory_space<vmem>>, vector<1x2x14xf32>
    %20 = vector.shape_cast %19 : vector<1x2x14xf32> to vector<2x14xf32>
    %21 = vector.shape_cast %18 : vector<2x14xf32> to vector<1x2x14xf32>
    tpu.vector_store %arg6[%c3_20, %c0_21, %c0_22], %21 {strides = array<i32>} : memref<8x2x32xf32, #tpu.memory_space<vmem>>, vector<1x2x14xf32>,
    %c0_23 = arith.constant 0 : index
    %c4 = arith.constant 4 : index
    %c0_24 = arith.constant 0 : index
    %22 = vector.load %arg0[%c0_23, %c4, %c0_24] : memref<2x8x14xf32, #tpu.memory_space<vmem>>, vector<2x1x14xf32>
    %23 = vector.shape_cast %22 : vector<2x1x14xf32> to vector<2x14xf32>
    %c4_25 = arith.constant 4 : index
    %c0_26 = arith.constant 0 : index
    %c0_27 = arith.constant 0 : index
    %24 = vector.load %arg6[%c4_25, %c0_26, %c0_27] : memref<8x2x32xf32, #tpu.memory_space<vmem>>, vector<1x2x14xf32>
    %25 = vector.shape_cast %24 : vector<1x2x14xf32> to vector<2x14xf32>
    %26 = vector.shape_cast %23 : vector<2x14xf32> to vector<1x2x14xf32>
    tpu.vector_store %arg6[%c4_25, %c0_26, %c0_27], %26 {strides = array<i32>} : memref<8x2x32xf32, #tpu.memory_space<vmem>>, vector<1x2x14xf32>,
    %c0_28 = arith.constant 0 : index
    %c5 = arith.constant 5 : index
    %c0_29 = arith.constant 0 : index
    %27 = vector.load %arg0[%c0_28, %c5, %c0_29] : memref<2x8x14xf32, #tpu.memory_space<vmem>>, vector<2x1x14xf32>
    %28 = vector.shape_cast %27 : vector<2x1x14xf32> to vector<2x14xf32>
    %c5_30 = arith.constant 5 : index
    %c0_31 = arith.constant 0 : index
    %c0_32 = arith.constant 0 : index
    %29 = vector.load %arg6[%c5_30, %c0_31, %c0_32] : memref<8x2x32xf32, #tpu.memory_space<vmem>>, vector<1x2x14xf32>
    %30 = vector.shape_cast %29 : vector<1x2x14xf32> to vector<2x14xf32>
    %31 = vector.shape_cast %28 : vector<2x14xf32> to vector<1x2x14xf32>
    tpu.vector_store %arg6[%c5_30, %c0_31, %c0_32], %31 {strides = array<i32>} : memref<8x2x32xf32, #tpu.memory_space<vmem>>, vector<1x2x14xf32>,
    %c0_33 = arith.constant 0 : index
    %c6 = arith.constant 6 : index
    %c0_34 = arith.constant 0 : index
    %32 = vector.load %arg0[%c0_33, %c6, %c0_34] : memref<2x8x14xf32, #tpu.memory_space<vmem>>, vector<2x1x14xf32>
    %33 = vector.shape_cast %32 : vector<2x1x14xf32> to vector<2x14xf32>
    %c6_35 = arith.constant 6 : index
    %c0_36 = arith.constant 0 : index
    %c0_37 = arith.constant 0 : index
    %34 = vector.load %arg6[%c6_35, %c0_36, %c0_37] : memref<8x2x32xf32, #tpu.memory_space<vmem>>, vector<1x2x14xf32>
    %35 = vector.shape_cast %34 : vector<1x2x14xf32> to vector<2x14xf32>
    %36 = vector.shape_cast %33 : vector<2x14xf32> to vector<1x2x14xf32>
    tpu.vector_store %arg6[%c6_35, %c0_36, %c0_37], %36 {strides = array<i32>} : memref<8x2x32xf32, #tpu.memory_space<vmem>>, vector<1x2x14xf32>,
    %c0_38 = arith.constant 0 : index
    %c7 = arith.constant 7 : index
    %c0_39 = arith.constant 0 : index
    %37 = vector.load %arg0[%c0_38, %c7, %c0_39] : memref<2x8x14xf32, #tpu.memory_space<vmem>>, vector<2x1x14xf32>
    %38 = vector.shape_cast %37 : vector<2x1x14xf32> to vector<2x14xf32>
    %c7_40 = arith.constant 7 : index
    %c0_41 = arith.constant 0 : index
    %c0_42 = arith.constant 0 : index
    %39 = vector.load %arg6[%c7_40, %c0_41, %c0_42] : memref<8x2x32xf32, #tpu.memory_space<vmem>>, vector<1x2x14xf32>
    %40 = vector.shape_cast %39 : vector<1x2x14xf32> to vector<2x14xf32>
    %41 = vector.shape_cast %38 : vector<2x14xf32> to vector<1x2x14xf32>
    tpu.vector_store %arg6[%c7_40, %c0_41, %c0_42], %41 {strides = array<i32>} : memref<8x2x32xf32, #tpu.memory_space<vmem>>, vector<1x2x14xf32>,
    %c0_i32 = arith.constant 0 : i32
    %c6_i32 = arith.constant 6 : i32
    %42 = arith.addi %c0_i32, %c6_i32 : i32
    %c1_i32 = arith.constant 1 : i32
    scf.for %arg10 = %c0_i32 to %42 step %c1_i32  : i32 {
      %58 = arith.index_cast %arg10 : i32 to index
      %c0_54 = arith.constant 0 : index
      %c0_55 = arith.constant 0 : index
      %59 = vector.load %arg1[%58, %c0_54, %c0_55] : memref<6x64x128xf32, #tpu.memory_space<vmem>>, vector<1x64x128xf32>
      %60 = vector.shape_cast %59 : vector<1x64x128xf32> to vector<64x128xf32>
      %61 = arith.index_cast %arg10 : i32 to index
      %c0_56 = arith.constant 0 : index
      %c0_57 = arith.constant 0 : index
      %62 = vector.load %arg2[%61, %c0_56, %c0_57] : memref<6x1x128xf32, #tpu.memory_space<vmem>>, vector<1x1x128xf32>
      %63 = vector.shape_cast %62 : vector<1x1x128xf32> to vector<1x128xf32>
      %64 = vector.shape_cast %63 : vector<1x128xf32> to vector<1x128xf32>
      %65 = vector.broadcast %64 : vector<1x128xf32> to vector<2x128xf32>
      %cst_58 = arith.constant 0.000000e+00 : f32
      %66 = vector.broadcast %cst_58 : f32 to vector<2x32xf32>
      %c0_59 = arith.constant 0 : index
      %c0_60 = arith.constant 0 : index
      %67 = vector.load %arg7[%c0_59, %c0_60] : memref<2x32xf32, #tpu.memory_space<vmem>>, vector<2x32xf32>
      tpu.vector_store %arg7[%c0_59, %c0_60], %66 {strides = array<i32>} : memref<2x32xf32, #tpu.memory_space<vmem>>, vector<2x32xf32>,
      %cst_61 = arith.constant 0.000000e+00 : f32
      %68 = vector.broadcast %cst_61 : f32 to vector<2x32xf32>
      %c0_62 = arith.constant 0 : index
      %c0_63 = arith.constant 0 : index
      %69 = vector.load %arg8[%c0_62, %c0_63] : memref<2x32xf32, #tpu.memory_space<vmem>>, vector<2x32xf32>
      tpu.vector_store %arg8[%c0_62, %c0_63], %68 {strides = array<i32>} : memref<2x32xf32, #tpu.memory_space<vmem>>, vector<2x32xf32>,
      %c0_i32_64 = arith.constant 0 : i32
      %70 = arith.index_cast %c0_i32_64 : i32 to index
      %c0_65 = arith.constant 0 : index
      %c0_66 = arith.constant 0 : index
      %71 = vector.load %arg6[%70, %c0_65, %c0_66] : memref<8x2x32xf32, #tpu.memory_space<vmem>>, vector<1x2x32xf32>
      %72 = vector.shape_cast %71 : vector<1x2x32xf32> to vector<2x32xf32>
      %c0_67 = arith.constant 0 : index
      %c0_68 = arith.constant 0 : index
      %73 = vector.load %arg9[%c0_67, %c0_68] : memref<2x64xf32, #tpu.memory_space<vmem>>, vector<2x32xf32>
      tpu.vector_store %arg9[%c0_67, %c0_68], %72 {strides = array<i32>} : memref<2x64xf32, #tpu.memory_space<vmem>>, vector<2x32xf32>,
      %c0_69 = arith.constant 0 : index
      %c0_70 = arith.constant 0 : index
      %74 = vector.load %arg7[%c0_69, %c0_70] : memref<2x32xf32, #tpu.memory_space<vmem>>, vector<2x32xf32>
      %c0_71 = arith.constant 0 : index
      %c32 = arith.constant 32 : index
      %75 = vector.load %arg9[%c0_71, %c32] : memref<2x64xf32, #tpu.memory_space<vmem>>, vector<2x32xf32>
      tpu.vector_store %arg9[%c0_71, %c32], %74 {strides = array<i32>} : memref<2x64xf32, #tpu.memory_space<vmem>>, vector<2x32xf32>,
      %c0_72 = arith.constant 0 : index
      %c0_73 = arith.constant 0 : index
      %76 = vector.load %arg9[%c0_72, %c0_73] : memref<2x64xf32, #tpu.memory_space<vmem>>, vector<2x64xf32>
      %cst_74 = arith.constant dense<0.000000e+00> : vector<2x128xf32>
      %77 = tpu.matmul %76, %60, %cst_74 {dimension_numbers = #tpu.dot_dimension_numbers<[1], [0], [0], [1], [0, 0, 1, 1], [], []>} : vector<2x64xf32>, vector<64x128xf32>, vector<2x128xf32> -> vector<2x128xf32>
      %78 = arith.addf %77, %65 : vector<2x128xf32>
      %79 = arith.negf %78 : vector<2x128xf32>
      %80 = math.exp %79 : vector<2x128xf32>
      %cst_75 = arith.constant 1.000000e+00 : f32
      %81 = vector.broadcast %cst_75 : f32 to vector<2x128xf32>
      %82 = arith.addf %81, %80 : vector<2x128xf32>
      %83 = arith.divf %81, %82 : vector<2x128xf32>
      %84 = math.tanh %78 : vector<2x128xf32>
      %85 = vector.extract_strided_slice %83 {offsets = [0, 0], sizes = [2, 32], strides = [1, 1]} : vector<2x128xf32> to vector<2x32xf32>
      %86 = vector.extract_strided_slice %83 {offsets = [0, 32], sizes = [2, 32], strides = [1, 1]} : vector<2x128xf32> to vector<2x32xf32>
      %87 = vector.extract_strided_slice %84 {offsets = [0, 64], sizes = [2, 32], strides = [1, 1]} : vector<2x128xf32> to vector<2x32xf32>
      %88 = vector.extract_strided_slice %83 {offsets = [0, 96], sizes = [2, 32], strides = [1, 1]} : vector<2x128xf32> to vector<2x32xf32>
      %c0_76 = arith.constant 0 : index
      %c0_77 = arith.constant 0 : index
      %89 = vector.load %arg8[%c0_76, %c0_77] : memref<2x32xf32, #tpu.memory_space<vmem>>, vector<2x32xf32>
      %90 = arith.mulf %86, %89 : vector<2x32xf32>
      %91 = arith.mulf %85, %87 : vector<2x32xf32>
      %92 = arith.addf %90, %91 : vector<2x32xf32>
      %93 = math.tanh %92 : vector<2x32xf32>
      %94 = arith.mulf %88, %93 : vector<2x32xf32>
      %c0_78 = arith.constant 0 : index
      %c0_79 = arith.constant 0 : index
      %95 = vector.load %arg8[%c0_78, %c0_79] : memref<2x32xf32, #tpu.memory_space<vmem>>, vector<2x32xf32>
      tpu.vector_store %arg8[%c0_78, %c0_79], %92 {strides = array<i32>} : memref<2x32xf32, #tpu.memory_space<vmem>>, vector<2x32xf32>,
      %c0_80 = arith.constant 0 : index
      %c0_81 = arith.constant 0 : index
      %96 = vector.load %arg7[%c0_80, %c0_81] : memref<2x32xf32, #tpu.memory_space<vmem>>, vector<2x32xf32>
      tpu.vector_store %arg7[%c0_80, %c0_81], %94 {strides = array<i32>} : memref<2x32xf32, #tpu.memory_space<vmem>>, vector<2x32xf32>,
      %97 = arith.index_cast %c0_i32_64 : i32 to index
      %c0_82 = arith.constant 0 : index
      %c0_83 = arith.constant 0 : index
      %98 = vector.load %arg6[%97, %c0_82, %c0_83] : memref<8x2x32xf32, #tpu.memory_space<vmem>>, vector<1x2x32xf32>
      %99 = vector.shape_cast %98 : vector<1x2x32xf32> to vector<2x32xf32>
      %100 = vector.shape_cast %94 : vector<2x32xf32> to vector<1x2x32xf32>
      tpu.vector_store %arg6[%97, %c0_82, %c0_83], %100 {strides = array<i32>} : memref<8x2x32xf32, #tpu.memory_space<vmem>>, vector<1x2x32xf32>,
      %c1_i32_84 = arith.constant 1 : i32
      %101 = arith.index_cast %c1_i32_84 : i32 to index
      %c0_85 = arith.constant 0 : index
      %c0_86 = arith.constant 0 : index
      %102 = vector.load %arg6[%101, %c0_85, %c0_86] : memref<8x2x32xf32, #tpu.memory_space<vmem>>, vector<1x2x32xf32>
      %103 = vector.shape_cast %102 : vector<1x2x32xf32> to vector<2x32xf32>
      %c0_87 = arith.constant 0 : index
      %c0_88 = arith.constant 0 : index
      %104 = vector.load %arg9[%c0_87, %c0_88] : memref<2x64xf32, #tpu.memory_space<vmem>>, vector<2x32xf32>
      tpu.vector_store %arg9[%c0_87, %c0_88], %103 {strides = array<i32>} : memref<2x64xf32, #tpu.memory_space<vmem>>, vector<2x32xf32>,
      %c0_89 = arith.constant 0 : index
      %c0_90 = arith.constant 0 : index
      %105 = vector.load %arg7[%c0_89, %c0_90] : memref<2x32xf32, #tpu.memory_space<vmem>>, vector<2x32xf32>
      %c0_91 = arith.constant 0 : index
      %c32_92 = arith.constant 32 : index
      %106 = vector.load %arg9[%c0_91, %c32_92] : memref<2x64xf32, #tpu.memory_space<vmem>>, vector<2x32xf32>
      tpu.vector_store %arg9[%c0_91, %c32_92], %105 {strides = array<i32>} : memref<2x64xf32, #tpu.memory_space<vmem>>, vector<2x32xf32>,
      %c0_93 = arith.constant 0 : index
      %c0_94 = arith.constant 0 : index
      %107 = vector.load %arg9[%c0_93, %c0_94] : memref<2x64xf32, #tpu.memory_space<vmem>>, vector<2x64xf32>
      %cst_95 = arith.constant dense<0.000000e+00> : vector<2x128xf32>
      %108 = tpu.matmul %107, %60, %cst_95 {dimension_numbers = #tpu.dot_dimension_numbers<[1], [0], [0], [1], [0, 0, 1, 1], [], []>} : vector<2x64xf32>, vector<64x128xf32>, vector<2x128xf32> -> vector<2x128xf32>
      %109 = arith.addf %108, %65 : vector<2x128xf32>
      %110 = arith.negf %109 : vector<2x128xf32>
      %111 = math.exp %110 : vector<2x128xf32>
      %cst_96 = arith.constant 1.000000e+00 : f32
      %112 = vector.broadcast %cst_96 : f32 to vector<2x128xf32>
      %113 = arith.addf %112, %111 : vector<2x128xf32>
      %114 = arith.divf %112, %113 : vector<2x128xf32>
      %115 = math.tanh %109 : vector<2x128xf32>
      %116 = vector.extract_strided_slice %114 {offsets = [0, 0], sizes = [2, 32], strides = [1, 1]} : vector<2x128xf32> to vector<2x32xf32>
      %117 = vector.extract_strided_slice %114 {offsets = [0, 32], sizes = [2, 32], strides = [1, 1]} : vector<2x128xf32> to vector<2x32xf32>
      %118 = vector.extract_strided_slice %115 {offsets = [0, 64], sizes = [2, 32], strides = [1, 1]} : vector<2x128xf32> to vector<2x32xf32>
      %119 = vector.extract_strided_slice %114 {offsets = [0, 96], sizes = [2, 32], strides = [1, 1]} : vector<2x128xf32> to vector<2x32xf32>
      %c0_97 = arith.constant 0 : index
      %c0_98 = arith.constant 0 : index
      %120 = vector.load %arg8[%c0_97, %c0_98] : memref<2x32xf32, #tpu.memory_space<vmem>>, vector<2x32xf32>
      %121 = arith.mulf %117, %120 : vector<2x32xf32>
      %122 = arith.mulf %116, %118 : vector<2x32xf32>
      %123 = arith.addf %121, %122 : vector<2x32xf32>
      %124 = math.tanh %123 : vector<2x32xf32>
      %125 = arith.mulf %119, %124 : vector<2x32xf32>
      %c0_99 = arith.constant 0 : index
      %c0_100 = arith.constant 0 : index
      %126 = vector.load %arg8[%c0_99, %c0_100] : memref<2x32xf32, #tpu.memory_space<vmem>>, vector<2x32xf32>
      tpu.vector_store %arg8[%c0_99, %c0_100], %123 {strides = array<i32>} : memref<2x32xf32, #tpu.memory_space<vmem>>, vector<2x32xf32>,
      %c0_101 = arith.constant 0 : index
      %c0_102 = arith.constant 0 : index
      %127 = vector.load %arg7[%c0_101, %c0_102] : memref<2x32xf32, #tpu.memory_space<vmem>>, vector<2x32xf32>
      tpu.vector_store %arg7[%c0_101, %c0_102], %125 {strides = array<i32>} : memref<2x32xf32, #tpu.memory_space<vmem>>, vector<2x32xf32>,
      %128 = arith.index_cast %c1_i32_84 : i32 to index
      %c0_103 = arith.constant 0 : index
      %c0_104 = arith.constant 0 : index
      %129 = vector.load %arg6[%128, %c0_103, %c0_104] : memref<8x2x32xf32, #tpu.memory_space<vmem>>, vector<1x2x32xf32>
      %130 = vector.shape_cast %129 : vector<1x2x32xf32> to vector<2x32xf32>
      %131 = vector.shape_cast %125 : vector<2x32xf32> to vector<1x2x32xf32>
      tpu.vector_store %arg6[%128, %c0_103, %c0_104], %131 {strides = array<i32>} : memref<8x2x32xf32, #tpu.memory_space<vmem>>, vector<1x2x32xf32>,
      %c2_i32 = arith.constant 2 : i32
      %132 = arith.index_cast %c2_i32 : i32 to index
      %c0_105 = arith.constant 0 : index
      %c0_106 = arith.constant 0 : index
      %133 = vector.load %arg6[%132, %c0_105, %c0_106] : memref<8x2x32xf32, #tpu.memory_space<vmem>>, vector<1x2x32xf32>
      %134 = vector.shape_cast %133 : vector<1x2x32xf32> to vector<2x32xf32>
      %c0_107 = arith.constant 0 : index
      %c0_108 = arith.constant 0 : index
      %135 = vector.load %arg9[%c0_107, %c0_108] : memref<2x64xf32, #tpu.memory_space<vmem>>, vector<2x32xf32>
      tpu.vector_store %arg9[%c0_107, %c0_108], %134 {strides = array<i32>} : memref<2x64xf32, #tpu.memory_space<vmem>>, vector<2x32xf32>,
      %c0_109 = arith.constant 0 : index
      %c0_110 = arith.constant 0 : index
      %136 = vector.load %arg7[%c0_109, %c0_110] : memref<2x32xf32, #tpu.memory_space<vmem>>, vector<2x32xf32>
      %c0_111 = arith.constant 0 : index
      %c32_112 = arith.constant 32 : index
      %137 = vector.load %arg9[%c0_111, %c32_112] : memref<2x64xf32, #tpu.memory_space<vmem>>, vector<2x32xf32>
      tpu.vector_store %arg9[%c0_111, %c32_112], %136 {strides = array<i32>} : memref<2x64xf32, #tpu.memory_space<vmem>>, vector<2x32xf32>,
      %c0_113 = arith.constant 0 : index
      %c0_114 = arith.constant 0 : index
      %138 = vector.load %arg9[%c0_113, %c0_114] : memref<2x64xf32, #tpu.memory_space<vmem>>, vector<2x64xf32>
      %cst_115 = arith.constant dense<0.000000e+00> : vector<2x128xf32>
      %139 = tpu.matmul %138, %60, %cst_115 {dimension_numbers = #tpu.dot_dimension_numbers<[1], [0], [0], [1], [0, 0, 1, 1], [], []>} : vector<2x64xf32>, vector<64x128xf32>, vector<2x128xf32> -> vector<2x128xf32>
      %140 = arith.addf %139, %65 : vector<2x128xf32>
      %141 = arith.negf %140 : vector<2x128xf32>
      %142 = math.exp %141 : vector<2x128xf32>
      %cst_116 = arith.constant 1.000000e+00 : f32
      %143 = vector.broadcast %cst_116 : f32 to vector<2x128xf32>
      %144 = arith.addf %143, %142 : vector<2x128xf32>
      %145 = arith.divf %143, %144 : vector<2x128xf32>
      %146 = math.tanh %140 : vector<2x128xf32>
      %147 = vector.extract_strided_slice %145 {offsets = [0, 0], sizes = [2, 32], strides = [1, 1]} : vector<2x128xf32> to vector<2x32xf32>
      %148 = vector.extract_strided_slice %145 {offsets = [0, 32], sizes = [2, 32], strides = [1, 1]} : vector<2x128xf32> to vector<2x32xf32>
      %149 = vector.extract_strided_slice %146 {offsets = [0, 64], sizes = [2, 32], strides = [1, 1]} : vector<2x128xf32> to vector<2x32xf32>
      %150 = vector.extract_strided_slice %145 {offsets = [0, 96], sizes = [2, 32], strides = [1, 1]} : vector<2x128xf32> to vector<2x32xf32>
      %c0_117 = arith.constant 0 : index
      %c0_118 = arith.constant 0 : index
      %151 = vector.load %arg8[%c0_117, %c0_118] : memref<2x32xf32, #tpu.memory_space<vmem>>, vector<2x32xf32>
      %152 = arith.mulf %148, %151 : vector<2x32xf32>
      %153 = arith.mulf %147, %149 : vector<2x32xf32>
      %154 = arith.addf %152, %153 : vector<2x32xf32>
      %155 = math.tanh %154 : vector<2x32xf32>
      %156 = arith.mulf %150, %155 : vector<2x32xf32>
      %c0_119 = arith.constant 0 : index
      %c0_120 = arith.constant 0 : index
      %157 = vector.load %arg8[%c0_119, %c0_120] : memref<2x32xf32, #tpu.memory_space<vmem>>, vector<2x32xf32>
      tpu.vector_store %arg8[%c0_119, %c0_120], %154 {strides = array<i32>} : memref<2x32xf32, #tpu.memory_space<vmem>>, vector<2x32xf32>,
      %c0_121 = arith.constant 0 : index
      %c0_122 = arith.constant 0 : index
      %158 = vector.load %arg7[%c0_121, %c0_122] : memref<2x32xf32, #tpu.memory_space<vmem>>, vector<2x32xf32>
      tpu.vector_store %arg7[%c0_121, %c0_122], %156 {strides = array<i32>} : memref<2x32xf32, #tpu.memory_space<vmem>>, vector<2x32xf32>,
      %159 = arith.index_cast %c2_i32 : i32 to index
      %c0_123 = arith.constant 0 : index
      %c0_124 = arith.constant 0 : index
      %160 = vector.load %arg6[%159, %c0_123, %c0_124] : memref<8x2x32xf32, #tpu.memory_space<vmem>>, vector<1x2x32xf32>
      %161 = vector.shape_cast %160 : vector<1x2x32xf32> to vector<2x32xf32>
      %162 = vector.shape_cast %156 : vector<2x32xf32> to vector<1x2x32xf32>
      tpu.vector_store %arg6[%159, %c0_123, %c0_124], %162 {strides = array<i32>} : memref<8x2x32xf32, #tpu.memory_space<vmem>>, vector<1x2x32xf32>,
      %c3_i32 = arith.constant 3 : i32
      %163 = arith.index_cast %c3_i32 : i32 to index
      %c0_125 = arith.constant 0 : index
      %c0_126 = arith.constant 0 : index
      %164 = vector.load %arg6[%163, %c0_125, %c0_126] : memref<8x2x32xf32, #tpu.memory_space<vmem>>, vector<1x2x32xf32>
      %165 = vector.shape_cast %164 : vector<1x2x32xf32> to vector<2x32xf32>
      %c0_127 = arith.constant 0 : index
      %c0_128 = arith.constant 0 : index
      %166 = vector.load %arg9[%c0_127, %c0_128] : memref<2x64xf32, #tpu.memory_space<vmem>>, vector<2x32xf32>
      tpu.vector_store %arg9[%c0_127, %c0_128], %165 {strides = array<i32>} : memref<2x64xf32, #tpu.memory_space<vmem>>, vector<2x32xf32>,
      %c0_129 = arith.constant 0 : index
      %c0_130 = arith.constant 0 : index
      %167 = vector.load %arg7[%c0_129, %c0_130] : memref<2x32xf32, #tpu.memory_space<vmem>>, vector<2x32xf32>
      %c0_131 = arith.constant 0 : index
      %c32_132 = arith.constant 32 : index
      %168 = vector.load %arg9[%c0_131, %c32_132] : memref<2x64xf32, #tpu.memory_space<vmem>>, vector<2x32xf32>
      tpu.vector_store %arg9[%c0_131, %c32_132], %167 {strides = array<i32>} : memref<2x64xf32, #tpu.memory_space<vmem>>, vector<2x32xf32>,
      %c0_133 = arith.constant 0 : index
      %c0_134 = arith.constant 0 : index
      %169 = vector.load %arg9[%c0_133, %c0_134] : memref<2x64xf32, #tpu.memory_space<vmem>>, vector<2x64xf32>
      %cst_135 = arith.constant dense<0.000000e+00> : vector<2x128xf32>
      %170 = tpu.matmul %169, %60, %cst_135 {dimension_numbers = #tpu.dot_dimension_numbers<[1], [0], [0], [1], [0, 0, 1, 1], [], []>} : vector<2x64xf32>, vector<64x128xf32>, vector<2x128xf32> -> vector<2x128xf32>
      %171 = arith.addf %170, %65 : vector<2x128xf32>
      %172 = arith.negf %171 : vector<2x128xf32>
      %173 = math.exp %172 : vector<2x128xf32>
      %cst_136 = arith.constant 1.000000e+00 : f32
      %174 = vector.broadcast %cst_136 : f32 to vector<2x128xf32>
      %175 = arith.addf %174, %173 : vector<2x128xf32>
      %176 = arith.divf %174, %175 : vector<2x128xf32>
      %177 = math.tanh %171 : vector<2x128xf32>
      %178 = vector.extract_strided_slice %176 {offsets = [0, 0], sizes = [2, 32], strides = [1, 1]} : vector<2x128xf32> to vector<2x32xf32>
      %179 = vector.extract_strided_slice %176 {offsets = [0, 32], sizes = [2, 32], strides = [1, 1]} : vector<2x128xf32> to vector<2x32xf32>
      %180 = vector.extract_strided_slice %177 {offsets = [0, 64], sizes = [2, 32], strides = [1, 1]} : vector<2x128xf32> to vector<2x32xf32>
      %181 = vector.extract_strided_slice %176 {offsets = [0, 96], sizes = [2, 32], strides = [1, 1]} : vector<2x128xf32> to vector<2x32xf32>
      %c0_137 = arith.constant 0 : index
      %c0_138 = arith.constant 0 : index
      %182 = vector.load %arg8[%c0_137, %c0_138] : memref<2x32xf32, #tpu.memory_space<vmem>>, vector<2x32xf32>
      %183 = arith.mulf %179, %182 : vector<2x32xf32>
      %184 = arith.mulf %178, %180 : vector<2x32xf32>
      %185 = arith.addf %183, %184 : vector<2x32xf32>
      %186 = math.tanh %185 : vector<2x32xf32>
      %187 = arith.mulf %181, %186 : vector<2x32xf32>
      %c0_139 = arith.constant 0 : index
      %c0_140 = arith.constant 0 : index
      %188 = vector.load %arg8[%c0_139, %c0_140] : memref<2x32xf32, #tpu.memory_space<vmem>>, vector<2x32xf32>
      tpu.vector_store %arg8[%c0_139, %c0_140], %185 {strides = array<i32>} : memref<2x32xf32, #tpu.memory_space<vmem>>, vector<2x32xf32>,
      %c0_141 = arith.constant 0 : index
      %c0_142 = arith.constant 0 : index
      %189 = vector.load %arg7[%c0_141, %c0_142] : memref<2x32xf32, #tpu.memory_space<vmem>>, vector<2x32xf32>
      tpu.vector_store %arg7[%c0_141, %c0_142], %187 {strides = array<i32>} : memref<2x32xf32, #tpu.memory_space<vmem>>, vector<2x32xf32>,
      %190 = arith.index_cast %c3_i32 : i32 to index
      %c0_143 = arith.constant 0 : index
      %c0_144 = arith.constant 0 : index
      %191 = vector.load %arg6[%190, %c0_143, %c0_144] : memref<8x2x32xf32, #tpu.memory_space<vmem>>, vector<1x2x32xf32>
      %192 = vector.shape_cast %191 : vector<1x2x32xf32> to vector<2x32xf32>
      %193 = vector.shape_cast %187 : vector<2x32xf32> to vector<1x2x32xf32>
      tpu.vector_store %arg6[%190, %c0_143, %c0_144], %193 {strides = array<i32>} : memref<8x2x32xf32, #tpu.memory_space<vmem>>, vector<1x2x32xf32>,
      %c4_i32 = arith.constant 4 : i32
      %194 = arith.index_cast %c4_i32 : i32 to index
      %c0_145 = arith.constant 0 : index
      %c0_146 = arith.constant 0 : index
      %195 = vector.load %arg6[%194, %c0_145, %c0_146] : memref<8x2x32xf32, #tpu.memory_space<vmem>>, vector<1x2x32xf32>
      %196 = vector.shape_cast %195 : vector<1x2x32xf32> to vector<2x32xf32>
      %c0_147 = arith.constant 0 : index
      %c0_148 = arith.constant 0 : index
      %197 = vector.load %arg9[%c0_147, %c0_148] : memref<2x64xf32, #tpu.memory_space<vmem>>, vector<2x32xf32>
      tpu.vector_store %arg9[%c0_147, %c0_148], %196 {strides = array<i32>} : memref<2x64xf32, #tpu.memory_space<vmem>>, vector<2x32xf32>,
      %c0_149 = arith.constant 0 : index
      %c0_150 = arith.constant 0 : index
      %198 = vector.load %arg7[%c0_149, %c0_150] : memref<2x32xf32, #tpu.memory_space<vmem>>, vector<2x32xf32>
      %c0_151 = arith.constant 0 : index
      %c32_152 = arith.constant 32 : index
      %199 = vector.load %arg9[%c0_151, %c32_152] : memref<2x64xf32, #tpu.memory_space<vmem>>, vector<2x32xf32>
      tpu.vector_store %arg9[%c0_151, %c32_152], %198 {strides = array<i32>} : memref<2x64xf32, #tpu.memory_space<vmem>>, vector<2x32xf32>,
      %c0_153 = arith.constant 0 : index
      %c0_154 = arith.constant 0 : index
      %200 = vector.load %arg9[%c0_153, %c0_154] : memref<2x64xf32, #tpu.memory_space<vmem>>, vector<2x64xf32>
      %cst_155 = arith.constant dense<0.000000e+00> : vector<2x128xf32>
      %201 = tpu.matmul %200, %60, %cst_155 {dimension_numbers = #tpu.dot_dimension_numbers<[1], [0], [0], [1], [0, 0, 1, 1], [], []>} : vector<2x64xf32>, vector<64x128xf32>, vector<2x128xf32> -> vector<2x128xf32>
      %202 = arith.addf %201, %65 : vector<2x128xf32>
      %203 = arith.negf %202 : vector<2x128xf32>
      %204 = math.exp %203 : vector<2x128xf32>
      %cst_156 = arith.constant 1.000000e+00 : f32
      %205 = vector.broadcast %cst_156 : f32 to vector<2x128xf32>
      %206 = arith.addf %205, %204 : vector<2x128xf32>
      %207 = arith.divf %205, %206 : vector<2x128xf32>
      %208 = math.tanh %202 : vector<2x128xf32>
      %209 = vector.extract_strided_slice %207 {offsets = [0, 0], sizes = [2, 32], strides = [1, 1]} : vector<2x128xf32> to vector<2x32xf32>
      %210 = vector.extract_strided_slice %207 {offsets = [0, 32], sizes = [2, 32], strides = [1, 1]} : vector<2x128xf32> to vector<2x32xf32>
      %211 = vector.extract_strided_slice %208 {offsets = [0, 64], sizes = [2, 32], strides = [1, 1]} : vector<2x128xf32> to vector<2x32xf32>
      %212 = vector.extract_strided_slice %207 {offsets = [0, 96], sizes = [2, 32], strides = [1, 1]} : vector<2x128xf32> to vector<2x32xf32>
      %c0_157 = arith.constant 0 : index
      %c0_158 = arith.constant 0 : index
      %213 = vector.load %arg8[%c0_157, %c0_158] : memref<2x32xf32, #tpu.memory_space<vmem>>, vector<2x32xf32>
      %214 = arith.mulf %210, %213 : vector<2x32xf32>
      %215 = arith.mulf %209, %211 : vector<2x32xf32>
      %216 = arith.addf %214, %215 : vector<2x32xf32>
      %217 = math.tanh %216 : vector<2x32xf32>
      %218 = arith.mulf %212, %217 : vector<2x32xf32>
      %c0_159 = arith.constant 0 : index
      %c0_160 = arith.constant 0 : index
      %219 = vector.load %arg8[%c0_159, %c0_160] : memref<2x32xf32, #tpu.memory_space<vmem>>, vector<2x32xf32>
      tpu.vector_store %arg8[%c0_159, %c0_160], %216 {strides = array<i32>} : memref<2x32xf32, #tpu.memory_space<vmem>>, vector<2x32xf32>,
      %c0_161 = arith.constant 0 : index
      %c0_162 = arith.constant 0 : index
      %220 = vector.load %arg7[%c0_161, %c0_162] : memref<2x32xf32, #tpu.memory_space<vmem>>, vector<2x32xf32>
      tpu.vector_store %arg7[%c0_161, %c0_162], %218 {strides = array<i32>} : memref<2x32xf32, #tpu.memory_space<vmem>>, vector<2x32xf32>,
      %221 = arith.index_cast %c4_i32 : i32 to index
      %c0_163 = arith.constant 0 : index
      %c0_164 = arith.constant 0 : index
      %222 = vector.load %arg6[%221, %c0_163, %c0_164] : memref<8x2x32xf32, #tpu.memory_space<vmem>>, vector<1x2x32xf32>
      %223 = vector.shape_cast %222 : vector<1x2x32xf32> to vector<2x32xf32>
      %224 = vector.shape_cast %218 : vector<2x32xf32> to vector<1x2x32xf32>
      tpu.vector_store %arg6[%221, %c0_163, %c0_164], %224 {strides = array<i32>} : memref<8x2x32xf32, #tpu.memory_space<vmem>>, vector<1x2x32xf32>,
      %c5_i32 = arith.constant 5 : i32
      %225 = arith.index_cast %c5_i32 : i32 to index
      %c0_165 = arith.constant 0 : index
      %c0_166 = arith.constant 0 : index
      %226 = vector.load %arg6[%225, %c0_165, %c0_166] : memref<8x2x32xf32, #tpu.memory_space<vmem>>, vector<1x2x32xf32>
      %227 = vector.shape_cast %226 : vector<1x2x32xf32> to vector<2x32xf32>
      %c0_167 = arith.constant 0 : index
      %c0_168 = arith.constant 0 : index
      %228 = vector.load %arg9[%c0_167, %c0_168] : memref<2x64xf32, #tpu.memory_space<vmem>>, vector<2x32xf32>
      tpu.vector_store %arg9[%c0_167, %c0_168], %227 {strides = array<i32>} : memref<2x64xf32, #tpu.memory_space<vmem>>, vector<2x32xf32>,
      %c0_169 = arith.constant 0 : index
      %c0_170 = arith.constant 0 : index
      %229 = vector.load %arg7[%c0_169, %c0_170] : memref<2x32xf32, #tpu.memory_space<vmem>>, vector<2x32xf32>
      %c0_171 = arith.constant 0 : index
      %c32_172 = arith.constant 32 : index
      %230 = vector.load %arg9[%c0_171, %c32_172] : memref<2x64xf32, #tpu.memory_space<vmem>>, vector<2x32xf32>
      tpu.vector_store %arg9[%c0_171, %c32_172], %229 {strides = array<i32>} : memref<2x64xf32, #tpu.memory_space<vmem>>, vector<2x32xf32>,
      %c0_173 = arith.constant 0 : index
      %c0_174 = arith.constant 0 : index
      %231 = vector.load %arg9[%c0_173, %c0_174] : memref<2x64xf32, #tpu.memory_space<vmem>>, vector<2x64xf32>
      %cst_175 = arith.constant dense<0.000000e+00> : vector<2x128xf32>
      %232 = tpu.matmul %231, %60, %cst_175 {dimension_numbers = #tpu.dot_dimension_numbers<[1], [0], [0], [1], [0, 0, 1, 1], [], []>} : vector<2x64xf32>, vector<64x128xf32>, vector<2x128xf32> -> vector<2x128xf32>
      %233 = arith.addf %232, %65 : vector<2x128xf32>
      %234 = arith.negf %233 : vector<2x128xf32>
      %235 = math.exp %234 : vector<2x128xf32>
      %cst_176 = arith.constant 1.000000e+00 : f32
      %236 = vector.broadcast %cst_176 : f32 to vector<2x128xf32>
      %237 = arith.addf %236, %235 : vector<2x128xf32>
      %238 = arith.divf %236, %237 : vector<2x128xf32>
      %239 = math.tanh %233 : vector<2x128xf32>
      %240 = vector.extract_strided_slice %238 {offsets = [0, 0], sizes = [2, 32], strides = [1, 1]} : vector<2x128xf32> to vector<2x32xf32>
      %241 = vector.extract_strided_slice %238 {offsets = [0, 32], sizes = [2, 32], strides = [1, 1]} : vector<2x128xf32> to vector<2x32xf32>
      %242 = vector.extract_strided_slice %239 {offsets = [0, 64], sizes = [2, 32], strides = [1, 1]} : vector<2x128xf32> to vector<2x32xf32>
      %243 = vector.extract_strided_slice %238 {offsets = [0, 96], sizes = [2, 32], strides = [1, 1]} : vector<2x128xf32> to vector<2x32xf32>
      %c0_177 = arith.constant 0 : index
      %c0_178 = arith.constant 0 : index
      %244 = vector.load %arg8[%c0_177, %c0_178] : memref<2x32xf32, #tpu.memory_space<vmem>>, vector<2x32xf32>
      %245 = arith.mulf %241, %244 : vector<2x32xf32>
      %246 = arith.mulf %240, %242 : vector<2x32xf32>
      %247 = arith.addf %245, %246 : vector<2x32xf32>
      %248 = math.tanh %247 : vector<2x32xf32>
      %249 = arith.mulf %243, %248 : vector<2x32xf32>
      %c0_179 = arith.constant 0 : index
      %c0_180 = arith.constant 0 : index
      %250 = vector.load %arg8[%c0_179, %c0_180] : memref<2x32xf32, #tpu.memory_space<vmem>>, vector<2x32xf32>
      tpu.vector_store %arg8[%c0_179, %c0_180], %247 {strides = array<i32>} : memref<2x32xf32, #tpu.memory_space<vmem>>, vector<2x32xf32>,
      %c0_181 = arith.constant 0 : index
      %c0_182 = arith.constant 0 : index
      %251 = vector.load %arg7[%c0_181, %c0_182] : memref<2x32xf32, #tpu.memory_space<vmem>>, vector<2x32xf32>
      tpu.vector_store %arg7[%c0_181, %c0_182], %249 {strides = array<i32>} : memref<2x32xf32, #tpu.memory_space<vmem>>, vector<2x32xf32>,
      %252 = arith.index_cast %c5_i32 : i32 to index
      %c0_183 = arith.constant 0 : index
      %c0_184 = arith.constant 0 : index
      %253 = vector.load %arg6[%252, %c0_183, %c0_184] : memref<8x2x32xf32, #tpu.memory_space<vmem>>, vector<1x2x32xf32>
      %254 = vector.shape_cast %253 : vector<1x2x32xf32> to vector<2x32xf32>
      %255 = vector.shape_cast %249 : vector<2x32xf32> to vector<1x2x32xf32>
      tpu.vector_store %arg6[%252, %c0_183, %c0_184], %255 {strides = array<i32>} : memref<8x2x32xf32, #tpu.memory_space<vmem>>, vector<1x2x32xf32>,
      %c6_i32_185 = arith.constant 6 : i32
      %256 = arith.index_cast %c6_i32_185 : i32 to index
      %c0_186 = arith.constant 0 : index
      %c0_187 = arith.constant 0 : index
      %257 = vector.load %arg6[%256, %c0_186, %c0_187] : memref<8x2x32xf32, #tpu.memory_space<vmem>>, vector<1x2x32xf32>
      %258 = vector.shape_cast %257 : vector<1x2x32xf32> to vector<2x32xf32>
      %c0_188 = arith.constant 0 : index
      %c0_189 = arith.constant 0 : index
      %259 = vector.load %arg9[%c0_188, %c0_189] : memref<2x64xf32, #tpu.memory_space<vmem>>, vector<2x32xf32>
      tpu.vector_store %arg9[%c0_188, %c0_189], %258 {strides = array<i32>} : memref<2x64xf32, #tpu.memory_space<vmem>>, vector<2x32xf32>,
      %c0_190 = arith.constant 0 : index
      %c0_191 = arith.constant 0 : index
      %260 = vector.load %arg7[%c0_190, %c0_191] : memref<2x32xf32, #tpu.memory_space<vmem>>, vector<2x32xf32>
      %c0_192 = arith.constant 0 : index
      %c32_193 = arith.constant 32 : index
      %261 = vector.load %arg9[%c0_192, %c32_193] : memref<2x64xf32, #tpu.memory_space<vmem>>, vector<2x32xf32>
      tpu.vector_store %arg9[%c0_192, %c32_193], %260 {strides = array<i32>} : memref<2x64xf32, #tpu.memory_space<vmem>>, vector<2x32xf32>,
      %c0_194 = arith.constant 0 : index
      %c0_195 = arith.constant 0 : index
      %262 = vector.load %arg9[%c0_194, %c0_195] : memref<2x64xf32, #tpu.memory_space<vmem>>, vector<2x64xf32>
      %cst_196 = arith.constant dense<0.000000e+00> : vector<2x128xf32>
      %263 = tpu.matmul %262, %60, %cst_196 {dimension_numbers = #tpu.dot_dimension_numbers<[1], [0], [0], [1], [0, 0, 1, 1], [], []>} : vector<2x64xf32>, vector<64x128xf32>, vector<2x128xf32> -> vector<2x128xf32>
      %264 = arith.addf %263, %65 : vector<2x128xf32>
      %265 = arith.negf %264 : vector<2x128xf32>
      %266 = math.exp %265 : vector<2x128xf32>
      %cst_197 = arith.constant 1.000000e+00 : f32
      %267 = vector.broadcast %cst_197 : f32 to vector<2x128xf32>
      %268 = arith.addf %267, %266 : vector<2x128xf32>
      %269 = arith.divf %267, %268 : vector<2x128xf32>
      %270 = math.tanh %264 : vector<2x128xf32>
      %271 = vector.extract_strided_slice %269 {offsets = [0, 0], sizes = [2, 32], strides = [1, 1]} : vector<2x128xf32> to vector<2x32xf32>
      %272 = vector.extract_strided_slice %269 {offsets = [0, 32], sizes = [2, 32], strides = [1, 1]} : vector<2x128xf32> to vector<2x32xf32>
      %273 = vector.extract_strided_slice %270 {offsets = [0, 64], sizes = [2, 32], strides = [1, 1]} : vector<2x128xf32> to vector<2x32xf32>
      %274 = vector.extract_strided_slice %269 {offsets = [0, 96], sizes = [2, 32], strides = [1, 1]} : vector<2x128xf32> to vector<2x32xf32>
      %c0_198 = arith.constant 0 : index
      %c0_199 = arith.constant 0 : index
      %275 = vector.load %arg8[%c0_198, %c0_199] : memref<2x32xf32, #tpu.memory_space<vmem>>, vector<2x32xf32>
      %276 = arith.mulf %272, %275 : vector<2x32xf32>
      %277 = arith.mulf %271, %273 : vector<2x32xf32>
      %278 = arith.addf %276, %277 : vector<2x32xf32>
      %279 = math.tanh %278 : vector<2x32xf32>
      %280 = arith.mulf %274, %279 : vector<2x32xf32>
      %c0_200 = arith.constant 0 : index
      %c0_201 = arith.constant 0 : index
      %281 = vector.load %arg8[%c0_200, %c0_201] : memref<2x32xf32, #tpu.memory_space<vmem>>, vector<2x32xf32>
      tpu.vector_store %arg8[%c0_200, %c0_201], %278 {strides = array<i32>} : memref<2x32xf32, #tpu.memory_space<vmem>>, vector<2x32xf32>,
      %c0_202 = arith.constant 0 : index
      %c0_203 = arith.constant 0 : index
      %282 = vector.load %arg7[%c0_202, %c0_203] : memref<2x32xf32, #tpu.memory_space<vmem>>, vector<2x32xf32>
      tpu.vector_store %arg7[%c0_202, %c0_203], %280 {strides = array<i32>} : memref<2x32xf32, #tpu.memory_space<vmem>>, vector<2x32xf32>,
      %283 = arith.index_cast %c6_i32_185 : i32 to index
      %c0_204 = arith.constant 0 : index
      %c0_205 = arith.constant 0 : index
      %284 = vector.load %arg6[%283, %c0_204, %c0_205] : memref<8x2x32xf32, #tpu.memory_space<vmem>>, vector<1x2x32xf32>
      %285 = vector.shape_cast %284 : vector<1x2x32xf32> to vector<2x32xf32>
      %286 = vector.shape_cast %280 : vector<2x32xf32> to vector<1x2x32xf32>
      tpu.vector_store %arg6[%283, %c0_204, %c0_205], %286 {strides = array<i32>} : memref<8x2x32xf32, #tpu.memory_space<vmem>>, vector<1x2x32xf32>,
      %c7_i32 = arith.constant 7 : i32
      %287 = arith.index_cast %c7_i32 : i32 to index
      %c0_206 = arith.constant 0 : index
      %c0_207 = arith.constant 0 : index
      %288 = vector.load %arg6[%287, %c0_206, %c0_207] : memref<8x2x32xf32, #tpu.memory_space<vmem>>, vector<1x2x32xf32>
      %289 = vector.shape_cast %288 : vector<1x2x32xf32> to vector<2x32xf32>
      %c0_208 = arith.constant 0 : index
      %c0_209 = arith.constant 0 : index
      %290 = vector.load %arg9[%c0_208, %c0_209] : memref<2x64xf32, #tpu.memory_space<vmem>>, vector<2x32xf32>
      tpu.vector_store %arg9[%c0_208, %c0_209], %289 {strides = array<i32>} : memref<2x64xf32, #tpu.memory_space<vmem>>, vector<2x32xf32>,
      %c0_210 = arith.constant 0 : index
      %c0_211 = arith.constant 0 : index
      %291 = vector.load %arg7[%c0_210, %c0_211] : memref<2x32xf32, #tpu.memory_space<vmem>>, vector<2x32xf32>
      %c0_212 = arith.constant 0 : index
      %c32_213 = arith.constant 32 : index
      %292 = vector.load %arg9[%c0_212, %c32_213] : memref<2x64xf32, #tpu.memory_space<vmem>>, vector<2x32xf32>
      tpu.vector_store %arg9[%c0_212, %c32_213], %291 {strides = array<i32>} : memref<2x64xf32, #tpu.memory_space<vmem>>, vector<2x32xf32>,
      %c0_214 = arith.constant 0 : index
      %c0_215 = arith.constant 0 : index
      %293 = vector.load %arg9[%c0_214, %c0_215] : memref<2x64xf32, #tpu.memory_space<vmem>>, vector<2x64xf32>
      %cst_216 = arith.constant dense<0.000000e+00> : vector<2x128xf32>
      %294 = tpu.matmul %293, %60, %cst_216 {dimension_numbers = #tpu.dot_dimension_numbers<[1], [0], [0], [1], [0, 0, 1, 1], [], []>} : vector<2x64xf32>, vector<64x128xf32>, vector<2x128xf32> -> vector<2x128xf32>
      %295 = arith.addf %294, %65 : vector<2x128xf32>
      %296 = arith.negf %295 : vector<2x128xf32>
      %297 = math.exp %296 : vector<2x128xf32>
      %cst_217 = arith.constant 1.000000e+00 : f32
      %298 = vector.broadcast %cst_217 : f32 to vector<2x128xf32>
      %299 = arith.addf %298, %297 : vector<2x128xf32>
      %300 = arith.divf %298, %299 : vector<2x128xf32>
      %301 = math.tanh %295 : vector<2x128xf32>
      %302 = vector.extract_strided_slice %300 {offsets = [0, 0], sizes = [2, 32], strides = [1, 1]} : vector<2x128xf32> to vector<2x32xf32>
      %303 = vector.extract_strided_slice %300 {offsets = [0, 32], sizes = [2, 32], strides = [1, 1]} : vector<2x128xf32> to vector<2x32xf32>
      %304 = vector.extract_strided_slice %301 {offsets = [0, 64], sizes = [2, 32], strides = [1, 1]} : vector<2x128xf32> to vector<2x32xf32>
      %305 = vector.extract_strided_slice %300 {offsets = [0, 96], sizes = [2, 32], strides = [1, 1]} : vector<2x128xf32> to vector<2x32xf32>
      %c0_218 = arith.constant 0 : index
      %c0_219 = arith.constant 0 : index
      %306 = vector.load %arg8[%c0_218, %c0_219] : memref<2x32xf32, #tpu.memory_space<vmem>>, vector<2x32xf32>
      %307 = arith.mulf %303, %306 : vector<2x32xf32>
      %308 = arith.mulf %302, %304 : vector<2x32xf32>
      %309 = arith.addf %307, %308 : vector<2x32xf32>
      %310 = math.tanh %309 : vector<2x32xf32>
      %311 = arith.mulf %305, %310 : vector<2x32xf32>
      %c0_220 = arith.constant 0 : index
      %c0_221 = arith.constant 0 : index
      %312 = vector.load %arg8[%c0_220, %c0_221] : memref<2x32xf32, #tpu.memory_space<vmem>>, vector<2x32xf32>
      tpu.vector_store %arg8[%c0_220, %c0_221], %309 {strides = array<i32>} : memref<2x32xf32, #tpu.memory_space<vmem>>, vector<2x32xf32>,
      %c0_222 = arith.constant 0 : index
      %c0_223 = arith.constant 0 : index
      %313 = vector.load %arg7[%c0_222, %c0_223] : memref<2x32xf32, #tpu.memory_space<vmem>>, vector<2x32xf32>
      tpu.vector_store %arg7[%c0_222, %c0_223], %311 {strides = array<i32>} : memref<2x32xf32, #tpu.memory_space<vmem>>, vector<2x32xf32>,
      %314 = arith.index_cast %c7_i32 : i32 to index
      %c0_224 = arith.constant 0 : index
      %c0_225 = arith.constant 0 : index
      %315 = vector.load %arg6[%314, %c0_224, %c0_225] : memref<8x2x32xf32, #tpu.memory_space<vmem>>, vector<1x2x32xf32>
      %316 = vector.shape_cast %315 : vector<1x2x32xf32> to vector<2x32xf32>
      %317 = vector.shape_cast %311 : vector<2x32xf32> to vector<1x2x32xf32>
      tpu.vector_store %arg6[%314, %c0_224, %c0_225], %317 {strides = array<i32>} : memref<8x2x32xf32, #tpu.memory_space<vmem>>, vector<1x2x32xf32>,
      %c8_i32 = arith.constant 8 : i32
    }
    %c6_i32_43 = arith.constant 6 : i32
    %c0_44 = arith.constant 0 : index
    %c0_45 = arith.constant 0 : index
    %43 = vector.load %arg7[%c0_44, %c0_45] : memref<2x32xf32, #tpu.memory_space<vmem>>, vector<2x32xf32>
    %c0_46 = arith.constant 0 : index
    %c0_47 = arith.constant 0 : index
    %44 = vector.load %arg3[%c0_46, %c0_47] : memref<1x32xf32, #tpu.memory_space<vmem>>, vector<1x32xf32>
    %45 = vector.broadcast %44 : vector<1x32xf32> to vector<2x32xf32>
    %46 = arith.mulf %43, %45 : vector<2x32xf32>
    %cst_48 = arith.constant dense<0.000000e+00> : vector<2xf32>
    %47 = vector.multi_reduction <add>, %46, %cst_48 [1] : vector<2x32xf32> to vector<2xf32>
    %48 = vector.shape_cast %47 : vector<2xf32> to vector<2x1xf32>
    %c0_49 = arith.constant 0 : index
    %c0_50 = arith.constant 0 : index
    %49 = vector.load %arg4[%c0_49, %c0_50] : memref<1x1xf32, #tpu.memory_space<vmem>>, vector<1x1xf32>
    %50 = vector.broadcast %49 : vector<1x1xf32> to vector<2x1xf32>
    %51 = arith.addf %48, %50 : vector<2x1xf32>
    %52 = arith.negf %51 : vector<2x1xf32>
    %53 = math.exp %52 : vector<2x1xf32>
    %cst_51 = arith.constant 1.000000e+00 : f32
    %54 = vector.broadcast %cst_51 : f32 to vector<2x1xf32>
    %55 = arith.addf %54, %53 : vector<2x1xf32>
    %56 = arith.divf %54, %55 : vector<2x1xf32>
    %c0_52 = arith.constant 0 : index
    %c0_53 = arith.constant 0 : index
    %57 = vector.load %arg5[%c0_52, %c0_53] : memref<2x1xf32, #tpu.memory_space<vmem>>, vector<2x1xf32>
    tpu.vector_store %arg5[%c0_52, %c0_53], %56 {strides = array<i32>} : memref<2x1xf32, #tpu.memory_space<vmem>>, vector<2x1xf32>,
    return
  }
}

</mosaic_0001>

<llo_original>
// kernel: success_predictor_forward.1
$region0: #{success_predictor_forward.1}
  #allocation0 [shape = 'u32[]', space=smem, size = 0x4, offset = 0x4, fixed_abs, tag = 'smem constant byte address 0x4 - core index']
  #allocation1 [shape = 'u32[144,128]{1,0:T(1,128)}', space=vmem, size = 0x12000, scoped, tag = 'internal scratch']
  #allocation2 [shape = 'f32[8,2,32]{2,1,0:T(2,128)}', space=vmem, size = 0x2000, scoped, tag = 'scratch operand']
  #allocation3 [shape = 'f32[2,32]{1,0:T(2,128)}', space=vmem, size = 0x400, scoped, tag = 'scratch operand']
  #allocation4 [shape = 'f32[2,32]{1,0:T(2,128)}', space=vmem, size = 0x400, scoped, tag = 'scratch operand']
  #allocation5 [shape = 'f32[2,64]{1,0:T(2,128)}', space=vmem, size = 0x400, scoped, tag = 'scratch operand']
  #allocation6 [shape = 'f32[1,1]{1,0:T(1,128)S(1)}', space=vmem, size = 0x200, scoped, tag = 'scoped memory for success_predictor_forward.1']
  %s0 = inlined_call_operand.hbm [shape: f32[2,8,14], index: 0, kind: input, shape index: {}]
  %s1 = inlined_call_operand.hbm [shape: f32[6,64,128], index: 1, kind: input, shape index: {}]
  %s2 = inlined_call_operand.hbm [shape: f32[6,1,128], index: 2, kind: input, shape index: {}]
  %s3 = inlined_call_operand.vmem [shape: f32[1,32], index: 3, kind: input, shape index: {}]
  %s4 = inlined_call_operand.<no memory space> [shape: f32[1,1], index: 4, kind: input, shape index: {}]
  %s5 = inlined_call_operand.vmem [shape: f32[2,1], index: 5, kind: output, shape index: {}]
  %s6 = sld [smem:[#allocation0]]
  $region49: #{success_predictor_forward.1} parent=0
    _
  %s8 = ssub.s32 1, %s6
  %s9 = scalar_select 0, %s8, %s6
  %v10 = vstv %s4
  %11 = vst [vmem:[#allocation6] sm:$0x1] %v10
  $region1: #{success_predictor_forward.1} parent=0
    #allocation7 [shape = 'u8[8192]{0}', space=vmem, size = 0x2000, scoped, tag = 'input window, operand 0, single buffered']
    #allocation8 [shape = 's32[1]{0}', space=sflag, size = 0x4, scoped, tag = 'scoped memory for success_predictor_forward.1']
    #allocation9 [shape = 'u8[196608]{0}', space=vmem, size = 0x30000, scoped, tag = 'input window, operand 1, single buffered']
    #allocation10 [shape = 's32[1]{0}', space=sflag, size = 0x4, scoped, tag = 'scoped memory for success_predictor_forward.1']
    #allocation11 [shape = 'u8[3072]{0}', space=vmem, size = 0xc00, scoped, tag = 'input window, operand 2, single buffered']
    %12 = vsyncpa [#allocation8], 0
    %13 = vsyncpa [#allocation10], 0
    // Predicated region
    $region2: #{success_predictor_forward.1} parent=1 // pred_check
      _
    $region3: #{success_predictor_forward.1} parent=1 // pred_check_branch
      %15 = sbr.rel (0) target = $region5
    $region4: #{success_predictor_forward.1} parent=1 // pred_region
      %s17 = ssub.s32 256, 256
      %18 = vsyncadd [#allocation8], %s17
      %s19 = sshll.u32 [#allocation7], 4
      %s20 = int_to_ptr.vmem [resolvable:$true] %s19
      %25 = dma.hbm_to_vmem [thread:$0]  %s0, 256, %s20, [#allocation8], 128, 128, 8
    $region5: #{success_predictor_forward.1} parent=1 // pred_fallthru
      _
    // Predicated region
    $region6: #{success_predictor_forward.1} parent=1 // pred_check
      _
    $region7: #{success_predictor_forward.1} parent=1 // pred_check_branch
      %27 = sbr.rel (0) target = $region9
    $region8: #{success_predictor_forward.1} parent=1 // pred_region
      %s29 = ssub.s32 6144, 6144
      %30 = vsyncadd [#allocation10], %s29
      %s31 = sshll.u32 [#allocation9], 4
      %s32 = int_to_ptr.vmem [resolvable:$true] %s31
      %37 = dma.hbm_to_vmem [thread:$0]  %s1, 6144, %s32, [#allocation10], 128, 128, 8
    $region9: #{success_predictor_forward.1} parent=1 // pred_fallthru
      _
    // Predicated region
    $region10: #{success_predictor_forward.1} parent=1 // pred_check
      _
    $region11: #{success_predictor_forward.1} parent=1 // pred_check_branch
      %39 = sbr.rel (0) target = $region13
    $region12: #{success_predictor_forward.1} parent=1 // pred_region
      %s41 = ssub.s32 96, 96
      %42 = vsyncadd [#allocation10], %s41
      %s43 = sshll.u32 [#allocation11], 4
      %s44 = int_to_ptr.vmem [resolvable:$true] %s43
      %49 = dma.hbm_to_vmem [thread:$0]  %s2, 96, %s44, [#allocation10], 16, 16, 1
    $region13: #{success_predictor_forward.1} parent=1 // pred_fallthru
      _
    // Predicated region
    $region14: #{success_predictor_forward.1} parent=1 // pred_check
      _
    $region15: #{success_predictor_forward.1} parent=1 // pred_check_branch
      %51 = sbr.rel (0) target = $region17
    $region16: #{success_predictor_forward.1} parent=1 // pred_region
      _
    $region17: #{success_predictor_forward.1} parent=1 // pred_fallthru
      _
    // Predicated region
    $region18: #{success_predictor_forward.1} parent=1 // pred_check
      _
    $region19: #{success_predictor_forward.1} parent=1 // pred_check_branch
      %53 = sbr.rel (0) target = $region21
    $region20: #{success_predictor_forward.1} parent=1 // pred_region
      _
    $region21: #{success_predictor_forward.1} parent=1 // pred_fallthru
      _
    // Predicated region
    $region22: #{success_predictor_forward.1} parent=1 // pred_check
      _
    $region23: #{success_predictor_forward.1} parent=1 // pred_check_branch
      %55 = sbr.rel (0) target = $region25
    $region24: #{success_predictor_forward.1} parent=1 // pred_region
      %56 = dma.done [#allocation8], 256
    $region25: #{success_predictor_forward.1} parent=1 // pred_fallthru
      _
    // Predicated region
    $region26: #{success_predictor_forward.1} parent=1 // pred_check
      _
    $region27: #{success_predictor_forward.1} parent=1 // pred_check_branch
      %58 = sbr.rel (0) target = $region29
    $region28: #{success_predictor_forward.1} parent=1 // pred_region
      %59 = dma.done [#allocation10], 6144
    $region29: #{success_predictor_forward.1} parent=1 // pred_fallthru
      _
    // Predicated region
    $region30: #{success_predictor_forward.1} parent=1 // pred_check
      _
    $region31: #{success_predictor_forward.1} parent=1 // pred_check_branch
      %61 = sbr.rel (0) target = $region33
    $region32: #{success_predictor_forward.1} parent=1 // pred_region
      %62 = dma.done [#allocation10], 96
    $region33: #{success_predictor_forward.1} parent=1 // pred_fallthru
      _
    %vm63 = vcmask 254976
    %64 = vst.msk [vmem:[#allocation2] sm:$0x3] %vm63, 0.0
    %65 = vst.msk [vmem:[#allocation2 + $0x2] sm:$0x3] %vm63, 0.0
    %66 = vst.msk [vmem:[#allocation2 + $0x4] sm:$0x3] %vm63, 0.0
    %67 = vst.msk [vmem:[#allocation2 + $0x6] sm:$0x3] %vm63, 0.0
    %68 = vst.msk [vmem:[#allocation2 + $0x8] sm:$0x3] %vm63, 0.0
    %69 = vst.msk [vmem:[#allocation2 + $0xa] sm:$0x3] %vm63, 0.0
    %70 = vst.msk [vmem:[#allocation2 + $0xc] sm:$0x3] %vm63, 0.0
    %71 = vst.msk [vmem:[#allocation2 + $0xe] sm:$0x3] %vm63, 0.0
    %v72 = vld [vmem:[#allocation7] sm:$0x1]
    %v73 = vld [vmem:[#allocation7 + $0x8] sm:$0x1]
    %v76 = vrot.slane %v73, 7
    %vm77 = vcmask 1041409
    %v78 = vsel %vm77, %v76, %v72
    %vm80 = vcmask 107520
    %81 = vst.msk [vmem:[#allocation2] sm:$0x3] %vm80, %v78
    %v82 = vld [vmem:[#allocation7 + $0x1] sm:$0x1]
    %v83 = vld [vmem:[#allocation7 + $0x9] sm:$0x1]
    %v86 = vrot.slane %v83, 7
    %v87 = vsel %vm77, %v86, %v82
    %s89 = scalar_lea.vmem [#allocation2], 2
    %90 = vst.msk [vmem:[%s89] sm:$0x3] %vm80, %v87
    %v91 = vld [vmem:[#allocation7 + $0x2] sm:$0x1]
    %v92 = vld [vmem:[#allocation7 + $0xa] sm:$0x1]
    %v95 = vrot.slane %v92, 7
    %v96 = vsel %vm77, %v95, %v91
    %s98 = scalar_lea.vmem [#allocation2], 4
    %99 = vst.msk [vmem:[%s98] sm:$0x3] %vm80, %v96
    %v100 = vld [vmem:[#allocation7 + $0x3] sm:$0x1]
    %v101 = vld [vmem:[#allocation7 + $0xb] sm:$0x1]
    %v104 = vrot.slane %v101, 7
    %v105 = vsel %vm77, %v104, %v100
    %s107 = scalar_lea.vmem [#allocation2], 6
    %108 = vst.msk [vmem:[%s107] sm:$0x3] %vm80, %v105
    %v109 = vld [vmem:[#allocation7 + $0x4] sm:$0x1]
    %v110 = vld [vmem:[#allocation7 + $0xc] sm:$0x1]
    %v113 = vrot.slane %v110, 7
    %v114 = vsel %vm77, %v113, %v109
    %s116 = scalar_lea.vmem [#allocation2], 8
    %117 = vst.msk [vmem:[%s116] sm:$0x3] %vm80, %v114
    %v118 = vld [vmem:[#allocation7 + $0x5] sm:$0x1]
    %v119 = vld [vmem:[#allocation7 + $0xd] sm:$0x1]
    %v122 = vrot.slane %v119, 7
    %v123 = vsel %vm77, %v122, %v118
    %s125 = scalar_lea.vmem [#allocation2], 10
    %126 = vst.msk [vmem:[%s125] sm:$0x3] %vm80, %v123
    %v127 = vld [vmem:[#allocation7 + $0x6] sm:$0x1]
    %v128 = vld [vmem:[#allocation7 + $0xe] sm:$0x1]
    %v131 = vrot.slane %v128, 7
    %v132 = vsel %vm77, %v131, %v127
    %s134 = scalar_lea.vmem [#allocation2], 12
    %135 = vst.msk [vmem:[%s134] sm:$0x3] %vm80, %v132
    %v136 = vld [vmem:[#allocation7 + $0x7] sm:$0x1]
    %v137 = vld [vmem:[#allocation7 + $0xf] sm:$0x1]
    %v140 = vrot.slane %v137, 7
    %v141 = vsel %vm77, %v140, %v136
    %s143 = scalar_lea.vmem [#allocation2], 14
    %144 = vst.msk [vmem:[%s143] sm:$0x3] %vm80, %v141
    loop: start=0, step=1, limit=6
    $region34: #{success_predictor_forward.1} parent=1 // loop_pre_header
      _
    $region35: #{success_predictor_forward.1} parent=1 // loop_header
      %s146 = sphi 0, %s150
      %p147 = scmp.ge.s32.totalorder %s146, 6
    $region36: #{success_predictor_forward.1} parent=1 // loop_header_branch
      %149 = sbr.rel (%p147) target = $region40
    $region37: #{success_predictor_forward.1} parent=1 // loop_body
      %s151 = smul.u32 %s146, 64
      %s152 = scalar_lea.vmem [#allocation9], %s151
      %v153 = vld [vmem:[%s152] sm:$0xff]
      %v154 = vld [vmem:[%s152 + $0x8] sm:$0xff]
      %v155 = vld [vmem:[%s152 + $0x10] sm:$0xff]
      %v156 = vld [vmem:[%s152 + $0x18] sm:$0xff]
      %v157 = vld [vmem:[%s152 + $0x20] sm:$0xff]
      %v158 = vld [vmem:[%s152 + $0x28] sm:$0xff]
      %v159 = vld [vmem:[%s152 + $0x30] sm:$0xff]
      %v160 = vld [vmem:[%s152 + $0x38] sm:$0xff]
      %s161 = scalar_lea.vmem [#allocation11], %s146
      %v162 = vld [vmem:[%s161] sm:$0x1]
      %v164 = vlaneseq
      %v165 = vshrl.u32 %v164, 7
      %v166 = vsub.s32 0, %v165
      %v167 = vrot.slane %v162, %v166
      %169 = vst.msk [vmem:[#allocation3] sm:$0x3] %vm63, 0.0
      %170 = vst.msk [vmem:[#allocation4] sm:$0x3] %vm63, 0.0
      %v171 = vld [vmem:[#allocation2] sm:$0x3]
      %172 = vst.msk [vmem:[#allocation5] sm:$0x3] %vm63, %v171
      %v173 = vld [vmem:[#allocation3] sm:$0x3]
      %175 = vrot.lane.b32.xlu0 %v173, 32
      %v176 = vpop.permute.xlu0 %175
      %vm178 = vcmask 517376
      %179 = vst.msk [vmem:[#allocation5] sm:$0x3] %vm178, %v176
      %v180 = vld [vmem:[#allocation5] sm:$0x3]
      %vm181 = vcmask 523264
      %v183 = vsel %vm181, %v180, 0
      %185 = vmatprep.subr.mxu0 0.0
      %186 = vmatpush1.msra.mxu0 0.0
      %187 = vmatprep.subr.mxu0 0.0
      %188 = vmatpush1.msra.mxu0 0.0
      %189 = vmatprep.subr.mxu0 0.0
      %190 = vmatpush1.msra.mxu0 0.0
      %191 = vmatprep.subr.mxu0 0.0
      %192 = vmatpush1.msra.mxu0 0.0
      %193 = vmatprep.subr.mxu0 0.0
      %194 = vmatpush1.msra.mxu0 0.0
      %195 = vmatprep.subr.mxu0 0.0
      %196 = vmatpush1.msra.mxu0 0.0
      %197 = vmatprep.subr.mxu0 0.0
      %198 = vmatpush1.msra.mxu0 0.0
      %199 = vmatprep.subr.mxu0 0.0
      %200 = vmatpush1.msra.mxu0 0.0
      %201 = vmatprep.subr.mxu0 0.0
      %202 = vmatpush1.msra.mxu0 %v160
      %203 = vmatprep.subr.mxu0 0.0
      %204 = vmatpush1.msra.mxu0 %v159
      %205 = vmatprep.subr.mxu0 0.0
      %206 = vmatpush1.msra.mxu0 %v158
      %207 = vmatprep.subr.mxu0 0.0
      %208 = vmatpush1.msra.mxu0 %v157
      %209 = vmatprep.subr.mxu0 0.0
      %210 = vmatpush1.msra.mxu0 %v156
      %211 = vmatprep.subr.mxu0 0.0
      %212 = vmatpush1.msra.mxu0 %v155
      %213 = vmatprep.subr.mxu0 0.0
      %214 = vmatpush1.msra.mxu0 %v154
      %215 = vmatprep.subr.mxu0 0.0
      %216 = vmatpush1.msra.mxu0 %v153
      %217 = vmatprep.subr.mxu0 0.0
      %218 = vmatpush2.msra.mxu0 0.0
      %219 = vmatprep.subr.mxu0 0.0
      %220 = vmatpush2.msra.mxu0 0.0
      %221 = vmatprep.subr.mxu0 0.0
      %222 = vmatpush2.msra.mxu0 0.0
      %223 = vmatprep.subr.mxu0 0.0
      %224 = vmatpush2.msra.mxu0 0.0
      %225 = vmatprep.subr.mxu0 0.0
      %226 = vmatpush2.msra.mxu0 0.0
      %227 = vmatprep.subr.mxu0 0.0
      %228 = vmatpush2.msra.mxu0 0.0
      %229 = vmatprep.subr.mxu0 0.0
      %230 = vmatpush2.msra.mxu0 0.0
      %231 = vmatprep.subr.mxu0 0.0
      %232 = vmatpush2.msra.mxu0 0.0
      %233 = vmatprep.subr.mxu0 0.0
      %234 = vmatpush2.msra.mxu0 0.0
      %235 = vmatprep.subr.mxu0 0.0
      %236 = vmatpush2.msra.mxu0 0.0
      %237 = vmatprep.subr.mxu0 0.0
      %238 = vmatpush2.msra.mxu0 0.0
      %239 = vmatprep.subr.mxu0 0.0
      %240 = vmatpush2.msra.mxu0 0.0
      %241 = vmatprep.subr.mxu0 0.0
      %242 = vmatpush2.msra.mxu0 0.0
      %243 = vmatprep.subr.mxu0 0.0
      %244 = vmatpush2.msra.mxu0 0.0
      %245 = vmatprep.subr.mxu0 0.0
      %246 = vmatpush2.msra.mxu0 0.0
      %247 = vmatprep.subr.mxu0 0.0
      %248 = vmatpush2.msra.mxu0 0.0
      %249 = vmatprep.mubr.f32.mxu0 0.0
      %250 = vmatmul.mubr.f32.gmra.mxu0 %v183
      %v251 = vpop.f32.mrf.mxu0
      %v252 = vadd.f32 %v167, %v251
      %v253 = vpop.f32.mrf.mxu0
      %254 = vdwg.mxu0
      %v255 = vxor.u32 %v252, 2147483648
      %v256 = vmul.f32 %v255, 1.442695
      %v257 = vpow.pop %v256
      %v258 = vadd.f32 %v257, 1.0
      %v259 = vrcp.pop %v258
      %v260 = vmul.f32 1.0, %v259
      %v261 = vtanh.pop %v252
      %v262 = vld [vmem:[#allocation4] sm:$0x3]
      %264 = vrot.lane.b32.xlu0 %v262, 32
      %v265 = vpop.permute.xlu0 %264
      %v267 = vmul.f32 %v260, %v265
      %269 = vrot.lane.b32.xlu0 %v261, 64
      %v270 = vpop.permute.xlu0 %269
      %v272 = vmul.f32 %v260, %v270
      %274 = vrot.lane.b32.xlu0 %v272, 32
      %v275 = vpop.permute.xlu0 %274
      %v277 = vadd.f32 %v267, %v275
      %v278 = vtanh.pop %v277
      %280 = vrot.lane.b32.xlu0 %v278, 64
      %v281 = vpop.permute.xlu0 %280
      %v283 = vmul.f32 %v260, %v281
      %285 = vrot.lane.b32.xlu0 %v277, 96
      %v286 = vpop.permute.xlu0 %285
      %288 = vst.msk [vmem:[#allocation4] sm:$0x3] %vm63, %v286
      %290 = vrot.lane.b32.xlu0 %v283, 32
      %v291 = vpop.permute.xlu0 %290
      %293 = vst.msk [vmem:[#allocation3] sm:$0x3] %vm63, %v291
      %294 = vst.msk [vmem:[#allocation2] sm:$0x3] %vm63, %v291
      %v295 = vld [vmem:[%s89] sm:$0x3]
      %296 = vst.msk [vmem:[#allocation5] sm:$0x3] %vm63, %v295
      %v297 = vld [vmem:[#allocation3] sm:$0x3]
      %299 = vrot.lane.b32.xlu0 %v297, 32
      %v300 = vpop.permute.xlu0 %299
      %302 = vst.msk [vmem:[#allocation5] sm:$0x3] %vm178, %v300
      %v303 = vld [vmem:[#allocation5] sm:$0x3]
      %v305 = vsel %vm181, %v303, 0
      %307 = vmatprep.subr.mxu0 0.0
      %308 = vmatpush1.msra.mxu0 0.0
      %309 = vmatprep.subr.mxu0 0.0
      %310 = vmatpush1.msra.mxu0 0.0
      %311 = vmatprep.subr.mxu0 0.0
      %312 = vmatpush1.msra.mxu0 0.0
      %313 = vmatprep.subr.mxu0 0.0
      %314 = vmatpush1.msra.mxu0 0.0
      %315 = vmatprep.subr.mxu0 0.0
      %316 = vmatpush1.msra.mxu0 0.0
      %317 = vmatprep.subr.mxu0 0.0
      %318 = vmatpush1.msra.mxu0 0.0
      %319 = vmatprep.subr.mxu0 0.0
      %320 = vmatpush1.msra.mxu0 0.0
      %321 = vmatprep.subr.mxu0 0.0
      %322 = vmatpush1.msra.mxu0 0.0
      %323 = vmatprep.subr.mxu0 0.0
      %324 = vmatpush1.msra.mxu0 %v160
      %325 = vmatprep.subr.mxu0 0.0
      %326 = vmatpush1.msra.mxu0 %v159
      %327 = vmatprep.subr.mxu0 0.0
      %328 = vmatpush1.msra.mxu0 %v158
      %329 = vmatprep.subr.mxu0 0.0
      %330 = vmatpush1.msra.mxu0 %v157
      %331 = vmatprep.subr.mxu0 0.0
      %332 = vmatpush1.msra.mxu0 %v156
      %333 = vmatprep.subr.mxu0 0.0
      %334 = vmatpush1.msra.mxu0 %v155
      %335 = vmatprep.subr.mxu0 0.0
      %336 = vmatpush1.msra.mxu0 %v154
      %337 = vmatprep.subr.mxu0 0.0
      %338 = vmatpush1.msra.mxu0 %v153
      %339 = vmatprep.subr.mxu0 0.0
      %340 = vmatpush2.msra.mxu0 0.0
      %341 = vmatprep.subr.mxu0 0.0
      %342 = vmatpush2.msra.mxu0 0.0
      %343 = vmatprep.subr.mxu0 0.0
      %344 = vmatpush2.msra.mxu0 0.0
      %345 = vmatprep.subr.mxu0 0.0
      %346 = vmatpush2.msra.mxu0 0.0
      %347 = vmatprep.subr.mxu0 0.0
      %348 = vmatpush2.msra.mxu0 0.0
      %349 = vmatprep.subr.mxu0 0.0
      %350 = vmatpush2.msra.mxu0 0.0
      %351 = vmatprep.subr.mxu0 0.0
      %352 = vmatpush2.msra.mxu0 0.0
      %353 = vmatprep.subr.mxu0 0.0
      %354 = vmatpush2.msra.mxu0 0.0
      %355 = vmatprep.subr.mxu0 0.0
      %356 = vmatpush2.msra.mxu0 0.0
      %357 = vmatprep.subr.mxu0 0.0
      %358 = vmatpush2.msra.mxu0 0.0
      %359 = vmatprep.subr.mxu0 0.0
      %360 = vmatpush2.msra.mxu0 0.0
      %361 = vmatprep.subr.mxu0 0.0
      %362 = vmatpush2.msra.mxu0 0.0
      %363 = vmatprep.subr.mxu0 0.0
      %364 = vmatpush2.msra.mxu0 0.0
      %365 = vmatprep.subr.mxu0 0.0
      %366 = vmatpush2.msra.mxu0 0.0
      %367 = vmatprep.subr.mxu0 0.0
      %368 = vmatpush2.msra.mxu0 0.0
      %369 = vmatprep.subr.mxu0 0.0
      %370 = vmatpush2.msra.mxu0 0.0
      %371 = vmatprep.mubr.f32.mxu0 0.0
      %372 = vmatmul.mubr.f32.gmra.mxu0 %v305
      %v373 = vpop.f32.mrf.mxu0
      %v374 = vadd.f32 %v167, %v373
      %v375 = vpop.f32.mrf.mxu0
      %376 = vdwg.mxu0
      %v377 = vxor.u32 %v374, 2147483648
      %v378 = vmul.f32 %v377, 1.442695
      %v379 = vpow.pop %v378
      %v380 = vadd.f32 %v379, 1.0
      %v381 = vrcp.pop %v380
      %v382 = vmul.f32 1.0, %v381
      %v383 = vtanh.pop %v374
      %v384 = vld [vmem:[#allocation4] sm:$0x3]
      %386 = vrot.lane.b32.xlu0 %v384, 32
      %v387 = vpop.permute.xlu0 %386
      %v389 = vmul.f32 %v382, %v387
      %391 = vrot.lane.b32.xlu0 %v383, 64
      %v392 = vpop.permute.xlu0 %391
      %v394 = vmul.f32 %v382, %v392
      %396 = vrot.lane.b32.xlu0 %v394, 32
      %v397 = vpop.permute.xlu0 %396
      %v399 = vadd.f32 %v389, %v397
      %v400 = vtanh.pop %v399
      %402 = vrot.lane.b32.xlu0 %v400, 64
      %v403 = vpop.permute.xlu0 %402
      %v405 = vmul.f32 %v382, %v403
      %407 = vrot.lane.b32.xlu0 %v399, 96
      %v408 = vpop.permute.xlu0 %407
      %410 = vst.msk [vmem:[#allocation4] sm:$0x3] %vm63, %v408
      %412 = vrot.lane.b32.xlu0 %v405, 32
      %v413 = vpop.permute.xlu0 %412
      %415 = vst.msk [vmem:[#allocation3] sm:$0x3] %vm63, %v413
      %416 = vst.msk [vmem:[%s89] sm:$0x3] %vm63, %v413
      %v417 = vld [vmem:[%s98] sm:$0x3]
      %418 = vst.msk [vmem:[#allocation5] sm:$0x3] %vm63, %v417
      %v419 = vld [vmem:[#allocation3] sm:$0x3]
      %421 = vrot.lane.b32.xlu0 %v419, 32
      %v422 = vpop.permute.xlu0 %421
      %424 = vst.msk [vmem:[#allocation5] sm:$0x3] %vm178, %v422
      %v425 = vld [vmem:[#allocation5] sm:$0x3]
      %v427 = vsel %vm181, %v425, 0
      %429 = vmatprep.subr.mxu0 0.0
      %430 = vmatpush1.msra.mxu0 0.0
      %431 = vmatprep.subr.mxu0 0.0
      %432 = vmatpush1.msra.mxu0 0.0
      %433 = vmatprep.subr.mxu0 0.0
      %434 = vmatpush1.msra.mxu0 0.0
      %435 = vmatprep.subr.mxu0 0.0
      %436 = vmatpush1.msra.mxu0 0.0
      %437 = vmatprep.subr.mxu0 0.0
      %438 = vmatpush1.msra.mxu0 0.0
      %439 = vmatprep.subr.mxu0 0.0
      %440 = vmatpush1.msra.mxu0 0.0
      %441 = vmatprep.subr.mxu0 0.0
      %442 = vmatpush1.msra.mxu0 0.0
      %443 = vmatprep.subr.mxu0 0.0
      %444 = vmatpush1.msra.mxu0 0.0
      %445 = vmatprep.subr.mxu0 0.0
      %446 = vmatpush1.msra.mxu0 %v160
      %447 = vmatprep.subr.mxu0 0.0
      %448 = vmatpush1.msra.mxu0 %v159
      %449 = vmatprep.subr.mxu0 0.0
      %450 = vmatpush1.msra.mxu0 %v158
      %451 = vmatprep.subr.mxu0 0.0
      %452 = vmatpush1.msra.mxu0 %v157
      %453 = vmatprep.subr.mxu0 0.0
      %454 = vmatpush1.msra.mxu0 %v156
      %455 = vmatprep.subr.mxu0 0.0
      %456 = vmatpush1.msra.mxu0 %v155
      %457 = vmatprep.subr.mxu0 0.0
      %458 = vmatpush1.msra.mxu0 %v154
      %459 = vmatprep.subr.mxu0 0.0
      %460 = vmatpush1.msra.mxu0 %v153
      %461 = vmatprep.subr.mxu0 0.0
      %462 = vmatpush2.msra.mxu0 0.0
      %463 = vmatprep.subr.mxu0 0.0
      %464 = vmatpush2.msra.mxu0 0.0
      %465 = vmatprep.subr.mxu0 0.0
      %466 = vmatpush2.msra.mxu0 0.0
      %467 = vmatprep.subr.mxu0 0.0
      %468 = vmatpush2.msra.mxu0 0.0
      %469 = vmatprep.subr.mxu0 0.0
      %470 = vmatpush2.msra.mxu0 0.0
      %471 = vmatprep.subr.mxu0 0.0
      %472 = vmatpush2.msra.mxu0 0.0
      %473 = vmatprep.subr.mxu0 0.0
      %474 = vmatpush2.msra.mxu0 0.0
      %475 = vmatprep.subr.mxu0 0.0
      %476 = vmatpush2.msra.mxu0 0.0
      %477 = vmatprep.subr.mxu0 0.0
      %478 = vmatpush2.msra.mxu0 0.0
      %479 = vmatprep.subr.mxu0 0.0
      %480 = vmatpush2.msra.mxu0 0.0
      %481 = vmatprep.subr.mxu0 0.0
      %482 = vmatpush2.msra.mxu0 0.0
      %483 = vmatprep.subr.mxu0 0.0
      %484 = vmatpush2.msra.mxu0 0.0
      %485 = vmatprep.subr.mxu0 0.0
      %486 = vmatpush2.msra.mxu0 0.0
      %487 = vmatprep.subr.mxu0 0.0
      %488 = vmatpush2.msra.mxu0 0.0
      %489 = vmatprep.subr.mxu0 0.0
      %490 = vmatpush2.msra.mxu0 0.0
      %491 = vmatprep.subr.mxu0 0.0
      %492 = vmatpush2.msra.mxu0 0.0
      %493 = vmatprep.mubr.f32.mxu0 0.0
      %494 = vmatmul.mubr.f32.gmra.mxu0 %v427
      %v495 = vpop.f32.mrf.mxu0
      %v496 = vadd.f32 %v167, %v495
      %v497 = vpop.f32.mrf.mxu0
      %498 = vdwg.mxu0
      %v499 = vxor.u32 %v496, 2147483648
      %v500 = vmul.f32 %v499, 1.442695
      %v501 = vpow.pop %v500
      %v502 = vadd.f32 %v501, 1.0
      %v503 = vrcp.pop %v502
      %v504 = vmul.f32 1.0, %v503
      %v505 = vtanh.pop %v496
      %v506 = vld [vmem:[#allocation4] sm:$0x3]
      %508 = vrot.lane.b32.xlu0 %v506, 32
      %v509 = vpop.permute.xlu0 %508
      %v511 = vmul.f32 %v504, %v509
      %513 = vrot.lane.b32.xlu0 %v505, 64
      %v514 = vpop.permute.xlu0 %513
      %v516 = vmul.f32 %v504, %v514
      %518 = vrot.lane.b32.xlu0 %v516, 32
      %v519 = vpop.permute.xlu0 %518
      %v521 = vadd.f32 %v511, %v519
      %v522 = vtanh.pop %v521
      %524 = vrot.lane.b32.xlu0 %v522, 64
      %v525 = vpop.permute.xlu0 %524
      %v527 = vmul.f32 %v504, %v525
      %529 = vrot.lane.b32.xlu0 %v521, 96
      %v530 = vpop.permute.xlu0 %529
      %532 = vst.msk [vmem:[#allocation4] sm:$0x3] %vm63, %v530
      %534 = vrot.lane.b32.xlu0 %v527, 32
      %v535 = vpop.permute.xlu0 %534
      %537 = vst.msk [vmem:[#allocation3] sm:$0x3] %vm63, %v535
      %538 = vst.msk [vmem:[%s98] sm:$0x3] %vm63, %v535
      %v539 = vld [vmem:[%s107] sm:$0x3]
      %540 = vst.msk [vmem:[#allocation5] sm:$0x3] %vm63, %v539
      %v541 = vld [vmem:[#allocation3] sm:$0x3]
      %543 = vrot.lane.b32.xlu0 %v541, 32
      %v544 = vpop.permute.xlu0 %543
      %546 = vst.msk [vmem:[#allocation5] sm:$0x3] %vm178, %v544
      %v547 = vld [vmem:[#allocation5] sm:$0x3]
      %v549 = vsel %vm181, %v547, 0
      %551 = vmatprep.subr.mxu0 0.0
      %552 = vmatpush1.msra.mxu0 0.0
      %553 = vmatprep.subr.mxu0 0.0
      %554 = vmatpush1.msra.mxu0 0.0
      %555 = vmatprep.subr.mxu0 0.0
      %556 = vmatpush1.msra.mxu0 0.0
      %557 = vmatprep.subr.mxu0 0.0
      %558 = vmatpush1.msra.mxu0 0.0
      %559 = vmatprep.subr.mxu0 0.0
      %560 = vmatpush1.msra.mxu0 0.0
      %561 = vmatprep.subr.mxu0 0.0
      %562 = vmatpush1.msra.mxu0 0.0
      %563 = vmatprep.subr.mxu0 0.0
      %564 = vmatpush1.msra.mxu0 0.0
      %565 = vmatprep.subr.mxu0 0.0
      %566 = vmatpush1.msra.mxu0 0.0
      %567 = vmatprep.subr.mxu0 0.0
      %568 = vmatpush1.msra.mxu0 %v160
      %569 = vmatprep.subr.mxu0 0.0
      %570 = vmatpush1.msra.mxu0 %v159
      %571 = vmatprep.subr.mxu0 0.0
      %572 = vmatpush1.msra.mxu0 %v158
      %573 = vmatprep.subr.mxu0 0.0
      %574 = vmatpush1.msra.mxu0 %v157
      %575 = vmatprep.subr.mxu0 0.0
      %576 = vmatpush1.msra.mxu0 %v156
      %577 = vmatprep.subr.mxu0 0.0
      %578 = vmatpush1.msra.mxu0 %v155
      %579 = vmatprep.subr.mxu0 0.0
      %580 = vmatpush1.msra.mxu0 %v154
      %581 = vmatprep.subr.mxu0 0.0
      %582 = vmatpush1.msra.mxu0 %v153
      %583 = vmatprep.subr.mxu0 0.0
      %584 = vmatpush2.msra.mxu0 0.0
      %585 = vmatprep.subr.mxu0 0.0
      %586 = vmatpush2.msra.mxu0 0.0
      %587 = vmatprep.subr.mxu0 0.0
      %588 = vmatpush2.msra.mxu0 0.0
      %589 = vmatprep.subr.mxu0 0.0
      %590 = vmatpush2.msra.mxu0 0.0
      %591 = vmatprep.subr.mxu0 0.0
      %592 = vmatpush2.msra.mxu0 0.0
      %593 = vmatprep.subr.mxu0 0.0
      %594 = vmatpush2.msra.mxu0 0.0
      %595 = vmatprep.subr.mxu0 0.0
      %596 = vmatpush2.msra.mxu0 0.0
      %597 = vmatprep.subr.mxu0 0.0
      %598 = vmatpush2.msra.mxu0 0.0
      %599 = vmatprep.subr.mxu0 0.0
      %600 = vmatpush2.msra.mxu0 0.0
      %601 = vmatprep.subr.mxu0 0.0
      %602 = vmatpush2.msra.mxu0 0.0
      %603 = vmatprep.subr.mxu0 0.0
      %604 = vmatpush2.msra.mxu0 0.0
      %605 = vmatprep.subr.mxu0 0.0
      %606 = vmatpush2.msra.mxu0 0.0
      %607 = vmatprep.subr.mxu0 0.0
      %608 = vmatpush2.msra.mxu0 0.0
      %609 = vmatprep.subr.mxu0 0.0
      %610 = vmatpush2.msra.mxu0 0.0
      %611 = vmatprep.subr.mxu0 0.0
      %612 = vmatpush2.msra.mxu0 0.0
      %613 = vmatprep.subr.mxu0 0.0
      %614 = vmatpush2.msra.mxu0 0.0
      %615 = vmatprep.mubr.f32.mxu0 0.0
      %616 = vmatmul.mubr.f32.gmra.mxu0 %v549
      %v617 = vpop.f32.mrf.mxu0
      %v618 = vadd.f32 %v167, %v617
      %v619 = vpop.f32.mrf.mxu0
      %620 = vdwg.mxu0
      %v621 = vxor.u32 %v618, 2147483648
      %v622 = vmul.f32 %v621, 1.442695
      %v623 = vpow.pop %v622
      %v624 = vadd.f32 %v623, 1.0
      %v625 = vrcp.pop %v624
      %v626 = vmul.f32 1.0, %v625
      %v627 = vtanh.pop %v618
      %v628 = vld [vmem:[#allocation4] sm:$0x3]
      %630 = vrot.lane.b32.xlu0 %v628, 32
      %v631 = vpop.permute.xlu0 %630
      %v633 = vmul.f32 %v626, %v631
      %635 = vrot.lane.b32.xlu0 %v627, 64
      %v636 = vpop.permute.xlu0 %635
      %v638 = vmul.f32 %v626, %v636
      %640 = vrot.lane.b32.xlu0 %v638, 32
      %v641 = vpop.permute.xlu0 %640
      %v643 = vadd.f32 %v633, %v641
      %v644 = vtanh.pop %v643
      %646 = vrot.lane.b32.xlu0 %v644, 64
      %v647 = vpop.permute.xlu0 %646
      %v649 = vmul.f32 %v626, %v647
      %651 = vrot.lane.b32.xlu0 %v643, 96
      %v652 = vpop.permute.xlu0 %651
      %654 = vst.msk [vmem:[#allocation4] sm:$0x3] %vm63, %v652
      %656 = vrot.lane.b32.xlu0 %v649, 32
      %v657 = vpop.permute.xlu0 %656
      %659 = vst.msk [vmem:[#allocation3] sm:$0x3] %vm63, %v657
      %660 = vst.msk [vmem:[%s107] sm:$0x3] %vm63, %v657
      %v661 = vld [vmem:[%s116] sm:$0x3]
      %662 = vst.msk [vmem:[#allocation5] sm:$0x3] %vm63, %v661
      %v663 = vld [vmem:[#allocation3] sm:$0x3]
      %665 = vrot.lane.b32.xlu0 %v663, 32
      %v666 = vpop.permute.xlu0 %665
      %668 = vst.msk [vmem:[#allocation5] sm:$0x3] %vm178, %v666
      %v669 = vld [vmem:[#allocation5] sm:$0x3]
      %v671 = vsel %vm181, %v669, 0
      %673 = vmatprep.subr.mxu0 0.0
      %674 = vmatpush1.msra.mxu0 0.0
      %675 = vmatprep.subr.mxu0 0.0
      %676 = vmatpush1.msra.mxu0 0.0
      %677 = vmatprep.subr.mxu0 0.0
      %678 = vmatpush1.msra.mxu0 0.0
      %679 = vmatprep.subr.mxu0 0.0
      %680 = vmatpush1.msra.mxu0 0.0
      %681 = vmatprep.subr.mxu0 0.0
      %682 = vmatpush1.msra.mxu0 0.0
      %683 = vmatprep.subr.mxu0 0.0
      %684 = vmatpush1.msra.mxu0 0.0
      %685 = vmatprep.subr.mxu0 0.0
      %686 = vmatpush1.msra.mxu0 0.0
      %687 = vmatprep.subr.mxu0 0.0
      %688 = vmatpush1.msra.mxu0 0.0
      %689 = vmatprep.subr.mxu0 0.0
      %690 = vmatpush1.msra.mxu0 %v160
      %691 = vmatprep.subr.mxu0 0.0
      %692 = vmatpush1.msra.mxu0 %v159
      %693 = vmatprep.subr.mxu0 0.0
      %694 = vmatpush1.msra.mxu0 %v158
      %695 = vmatprep.subr.mxu0 0.0
      %696 = vmatpush1.msra.mxu0 %v157
      %697 = vmatprep.subr.mxu0 0.0
      %698 = vmatpush1.msra.mxu0 %v156
      %699 = vmatprep.subr.mxu0 0.0
      %700 = vmatpush1.msra.mxu0 %v155
      %701 = vmatprep.subr.mxu0 0.0
      %702 = vmatpush1.msra.mxu0 %v154
      %703 = vmatprep.subr.mxu0 0.0
      %704 = vmatpush1.msra.mxu0 %v153
      %705 = vmatprep.subr.mxu0 0.0
      %706 = vmatpush2.msra.mxu0 0.0
      %707 = vmatprep.subr.mxu0 0.0
      %708 = vmatpush2.msra.mxu0 0.0
      %709 = vmatprep.subr.mxu0 0.0
      %710 = vmatpush2.msra.mxu0 0.0
      %711 = vmatprep.subr.mxu0 0.0
      %712 = vmatpush2.msra.mxu0 0.0
      %713 = vmatprep.subr.mxu0 0.0
      %714 = vmatpush2.msra.mxu0 0.0
      %715 = vmatprep.subr.mxu0 0.0
      %716 = vmatpush2.msra.mxu0 0.0
      %717 = vmatprep.subr.mxu0 0.0
      %718 = vmatpush2.msra.mxu0 0.0
      %719 = vmatprep.subr.mxu0 0.0
      %720 = vmatpush2.msra.mxu0 0.0
      %721 = vmatprep.subr.mxu0 0.0
      %722 = vmatpush2.msra.mxu0 0.0
      %723 = vmatprep.subr.mxu0 0.0
      %724 = vmatpush2.msra.mxu0 0.0
      %725 = vmatprep.subr.mxu0 0.0
      %726 = vmatpush2.msra.mxu0 0.0
      %727 = vmatprep.subr.mxu0 0.0
      %728 = vmatpush2.msra.mxu0 0.0
      %729 = vmatprep.subr.mxu0 0.0
      %730 = vmatpush2.msra.mxu0 0.0
      %731 = vmatprep.subr.mxu0 0.0
      %732 = vmatpush2.msra.mxu0 0.0
      %733 = vmatprep.subr.mxu0 0.0
      %734 = vmatpush2.msra.mxu0 0.0
      %735 = vmatprep.subr.mxu0 0.0
      %736 = vmatpush2.msra.mxu0 0.0
      %737 = vmatprep.mubr.f32.mxu0 0.0
      %738 = vmatmul.mubr.f32.gmra.mxu0 %v671
      %v739 = vpop.f32.mrf.mxu0
      %v740 = vadd.f32 %v167, %v739
      %v741 = vpop.f32.mrf.mxu0
      %742 = vdwg.mxu0
      %v743 = vxor.u32 %v740, 2147483648
      %v744 = vmul.f32 %v743, 1.442695
      %v745 = vpow.pop %v744
      %v746 = vadd.f32 %v745, 1.0
      %v747 = vrcp.pop %v746
      %v748 = vmul.f32 1.0, %v747
      %v749 = vtanh.pop %v740
      %v750 = vld [vmem:[#allocation4] sm:$0x3]
      %752 = vrot.lane.b32.xlu0 %v750, 32
      %v753 = vpop.permute.xlu0 %752
      %v755 = vmul.f32 %v748, %v753
      %757 = vrot.lane.b32.xlu0 %v749, 64
      %v758 = vpop.permute.xlu0 %757
      %v760 = vmul.f32 %v748, %v758
      %762 = vrot.lane.b32.xlu0 %v760, 32
      %v763 = vpop.permute.xlu0 %762
      %v765 = vadd.f32 %v755, %v763
      %v766 = vtanh.pop %v765
      %768 = vrot.lane.b32.xlu0 %v766, 64
      %v769 = vpop.permute.xlu0 %768
      %v771 = vmul.f32 %v748, %v769
      %773 = vrot.lane.b32.xlu0 %v765, 96
      %v774 = vpop.permute.xlu0 %773
      %776 = vst.msk [vmem:[#allocation4] sm:$0x3] %vm63, %v774
      %778 = vrot.lane.b32.xlu0 %v771, 32
      %v779 = vpop.permute.xlu0 %778
      %781 = vst.msk [vmem:[#allocation3] sm:$0x3] %vm63, %v779
      %782 = vst.msk [vmem:[%s116] sm:$0x3] %vm63, %v779
      %v783 = vld [vmem:[%s125] sm:$0x3]
      %784 = vst.msk [vmem:[#allocation5] sm:$0x3] %vm63, %v783
      %v785 = vld [vmem:[#allocation3] sm:$0x3]
      %787 = vrot.lane.b32.xlu0 %v785, 32
      %v788 = vpop.permute.xlu0 %787
      %790 = vst.msk [vmem:[#allocation5] sm:$0x3] %vm178, %v788
      %v791 = vld [vmem:[#allocation5] sm:$0x3]
      %v793 = vsel %vm181, %v791, 0
      %795 = vmatprep.subr.mxu0 0.0
      %796 = vmatpush1.msra.mxu0 0.0
      %797 = vmatprep.subr.mxu0 0.0
      %798 = vmatpush1.msra.mxu0 0.0
      %799 = vmatprep.subr.mxu0 0.0
      %800 = vmatpush1.msra.mxu0 0.0
      %801 = vmatprep.subr.mxu0 0.0
      %802 = vmatpush1.msra.mxu0 0.0
      %803 = vmatprep.subr.mxu0 0.0
      %804 = vmatpush1.msra.mxu0 0.0
      %805 = vmatprep.subr.mxu0 0.0
      %806 = vmatpush1.msra.mxu0 0.0
      %807 = vmatprep.subr.mxu0 0.0
      %808 = vmatpush1.msra.mxu0 0.0
      %809 = vmatprep.subr.mxu0 0.0
      %810 = vmatpush1.msra.mxu0 0.0
      %811 = vmatprep.subr.mxu0 0.0
      %812 = vmatpush1.msra.mxu0 %v160
      %813 = vmatprep.subr.mxu0 0.0
      %814 = vmatpush1.msra.mxu0 %v159
      %815 = vmatprep.subr.mxu0 0.0
      %816 = vmatpush1.msra.mxu0 %v158
      %817 = vmatprep.subr.mxu0 0.0
      %818 = vmatpush1.msra.mxu0 %v157
      %819 = vmatprep.subr.mxu0 0.0
      %820 = vmatpush1.msra.mxu0 %v156
      %821 = vmatprep.subr.mxu0 0.0
      %822 = vmatpush1.msra.mxu0 %v155
      %823 = vmatprep.subr.mxu0 0.0
      %824 = vmatpush1.msra.mxu0 %v154
      %825 = vmatprep.subr.mxu0 0.0
      %826 = vmatpush1.msra.mxu0 %v153
      %827 = vmatprep.subr.mxu0 0.0
      %828 = vmatpush2.msra.mxu0 0.0
      %829 = vmatprep.subr.mxu0 0.0
      %830 = vmatpush2.msra.mxu0 0.0
      %831 = vmatprep.subr.mxu0 0.0
      %832 = vmatpush2.msra.mxu0 0.0
      %833 = vmatprep.subr.mxu0 0.0
      %834 = vmatpush2.msra.mxu0 0.0
      %835 = vmatprep.subr.mxu0 0.0
      %836 = vmatpush2.msra.mxu0 0.0
      %837 = vmatprep.subr.mxu0 0.0
      %838 = vmatpush2.msra.mxu0 0.0
      %839 = vmatprep.subr.mxu0 0.0
      %840 = vmatpush2.msra.mxu0 0.0
      %841 = vmatprep.subr.mxu0 0.0
      %842 = vmatpush2.msra.mxu0 0.0
      %843 = vmatprep.subr.mxu0 0.0
      %844 = vmatpush2.msra.mxu0 0.0
      %845 = vmatprep.subr.mxu0 0.0
      %846 = vmatpush2.msra.mxu0 0.0
      %847 = vmatprep.subr.mxu0 0.0
      %848 = vmatpush2.msra.mxu0 0.0
      %849 = vmatprep.subr.mxu0 0.0
      %850 = vmatpush2.msra.mxu0 0.0
      %851 = vmatprep.subr.mxu0 0.0
      %852 = vmatpush2.msra.mxu0 0.0
      %853 = vmatprep.subr.mxu0 0.0
      %854 = vmatpush2.msra.mxu0 0.0
      %855 = vmatprep.subr.mxu0 0.0
      %856 = vmatpush2.msra.mxu0 0.0
      %857 = vmatprep.subr.mxu0 0.0
      %858 = vmatpush2.msra.mxu0 0.0
      %859 = vmatprep.mubr.f32.mxu0 0.0
      %860 = vmatmul.mubr.f32.gmra.mxu0 %v793
      %v861 = vpop.f32.mrf.mxu0
      %v862 = vadd.f32 %v167, %v861
      %v863 = vpop.f32.mrf.mxu0
      %864 = vdwg.mxu0
      %v865 = vxor.u32 %v862, 2147483648
      %v866 = vmul.f32 %v865, 1.442695
      %v867 = vpow.pop %v866
      %v868 = vadd.f32 %v867, 1.0
      %v869 = vrcp.pop %v868
      %v870 = vmul.f32 1.0, %v869
      %v871 = vtanh.pop %v862
      %v872 = vld [vmem:[#allocation4] sm:$0x3]
      %874 = vrot.lane.b32.xlu0 %v872, 32
      %v875 = vpop.permute.xlu0 %874
      %v877 = vmul.f32 %v870, %v875
      %879 = vrot.lane.b32.xlu0 %v871, 64
      %v880 = vpop.permute.xlu0 %879
      %v882 = vmul.f32 %v870, %v880
      %884 = vrot.lane.b32.xlu0 %v882, 32
      %v885 = vpop.permute.xlu0 %884
      %v887 = vadd.f32 %v877, %v885
      %v888 = vtanh.pop %v887
      %890 = vrot.lane.b32.xlu0 %v888, 64
      %v891 = vpop.permute.xlu0 %890
      %v893 = vmul.f32 %v870, %v891
      %895 = vrot.lane.b32.xlu0 %v887, 96
      %v896 = vpop.permute.xlu0 %895
      %898 = vst.msk [vmem:[#allocation4] sm:$0x3] %vm63, %v896
      %900 = vrot.lane.b32.xlu0 %v893, 32
      %v901 = vpop.permute.xlu0 %900
      %903 = vst.msk [vmem:[#allocation3] sm:$0x3] %vm63, %v901
      %904 = vst.msk [vmem:[%s125] sm:$0x3] %vm63, %v901
      %v905 = vld [vmem:[%s134] sm:$0x3]
      %906 = vst.msk [vmem:[#allocation5] sm:$0x3] %vm63, %v905
      %v907 = vld [vmem:[#allocation3] sm:$0x3]
      %909 = vrot.lane.b32.xlu0 %v907, 32
      %v910 = vpop.permute.xlu0 %909
      %912 = vst.msk [vmem:[#allocation5] sm:$0x3] %vm178, %v910
      %v913 = vld [vmem:[#allocation5] sm:$0x3]
      %v915 = vsel %vm181, %v913, 0
      %917 = vmatprep.subr.mxu0 0.0
      %918 = vmatpush1.msra.mxu0 0.0
      %919 = vmatprep.subr.mxu0 0.0
      %920 = vmatpush1.msra.mxu0 0.0
      %921 = vmatprep.subr.mxu0 0.0
      %922 = vmatpush1.msra.mxu0 0.0
      %923 = vmatprep.subr.mxu0 0.0
      %924 = vmatpush1.msra.mxu0 0.0
      %925 = vmatprep.subr.mxu0 0.0
      %926 = vmatpush1.msra.mxu0 0.0
      %927 = vmatprep.subr.mxu0 0.0
      %928 = vmatpush1.msra.mxu0 0.0
      %929 = vmatprep.subr.mxu0 0.0
      %930 = vmatpush1.msra.mxu0 0.0
      %931 = vmatprep.subr.mxu0 0.0
      %932 = vmatpush1.msra.mxu0 0.0
      %933 = vmatprep.subr.mxu0 0.0
      %934 = vmatpush1.msra.mxu0 %v160
      %935 = vmatprep.subr.mxu0 0.0
      %936 = vmatpush1.msra.mxu0 %v159
      %937 = vmatprep.subr.mxu0 0.0
      %938 = vmatpush1.msra.mxu0 %v158
      %939 = vmatprep.subr.mxu0 0.0
      %940 = vmatpush1.msra.mxu0 %v157
      %941 = vmatprep.subr.mxu0 0.0
      %942 = vmatpush1.msra.mxu0 %v156
      %943 = vmatprep.subr.mxu0 0.0
      %944 = vmatpush1.msra.mxu0 %v155
      %945 = vmatprep.subr.mxu0 0.0
      %946 = vmatpush1.msra.mxu0 %v154
      %947 = vmatprep.subr.mxu0 0.0
      %948 = vmatpush1.msra.mxu0 %v153
      %949 = vmatprep.subr.mxu0 0.0
      %950 = vmatpush2.msra.mxu0 0.0
      %951 = vmatprep.subr.mxu0 0.0
      %952 = vmatpush2.msra.mxu0 0.0
      %953 = vmatprep.subr.mxu0 0.0
      %954 = vmatpush2.msra.mxu0 0.0
      %955 = vmatprep.subr.mxu0 0.0
      %956 = vmatpush2.msra.mxu0 0.0
      %957 = vmatprep.subr.mxu0 0.0
      %958 = vmatpush2.msra.mxu0 0.0
      %959 = vmatprep.subr.mxu0 0.0
      %960 = vmatpush2.msra.mxu0 0.0
      %961 = vmatprep.subr.mxu0 0.0
      %962 = vmatpush2.msra.mxu0 0.0
      %963 = vmatprep.subr.mxu0 0.0
      %964 = vmatpush2.msra.mxu0 0.0
      %965 = vmatprep.subr.mxu0 0.0
      %966 = vmatpush2.msra.mxu0 0.0
      %967 = vmatprep.subr.mxu0 0.0
      %968 = vmatpush2.msra.mxu0 0.0
      %969 = vmatprep.subr.mxu0 0.0
      %970 = vmatpush2.msra.mxu0 0.0
      %971 = vmatprep.subr.mxu0 0.0
      %972 = vmatpush2.msra.mxu0 0.0
      %973 = vmatprep.subr.mxu0 0.0
      %974 = vmatpush2.msra.mxu0 0.0
      %975 = vmatprep.subr.mxu0 0.0
      %976 = vmatpush2.msra.mxu0 0.0
      %977 = vmatprep.subr.mxu0 0.0
      %978 = vmatpush2.msra.mxu0 0.0
      %979 = vmatprep.subr.mxu0 0.0
      %980 = vmatpush2.msra.mxu0 0.0
      %981 = vmatprep.mubr.f32.mxu0 0.0
      %982 = vmatmul.mubr.f32.gmra.mxu0 %v915
      %v983 = vpop.f32.mrf.mxu0
      %v984 = vadd.f32 %v167, %v983
      %v985 = vpop.f32.mrf.mxu0
      %986 = vdwg.mxu0
      %v987 = vxor.u32 %v984, 2147483648
      %v988 = vmul.f32 %v987, 1.442695
      %v989 = vpow.pop %v988
      %v990 = vadd.f32 %v989, 1.0
      %v991 = vrcp.pop %v990
      %v992 = vmul.f32 1.0, %v991
      %v993 = vtanh.pop %v984
      %v994 = vld [vmem:[#allocation4] sm:$0x3]
      %996 = vrot.lane.b32.xlu0 %v994, 32
      %v997 = vpop.permute.xlu0 %996
      %v999 = vmul.f32 %v992, %v997
      %1001 = vrot.lane.b32.xlu0 %v993, 64
      %v1002 = vpop.permute.xlu0 %1001
      %v1004 = vmul.f32 %v992, %v1002
      %1006 = vrot.lane.b32.xlu0 %v1004, 32
      %v1007 = vpop.permute.xlu0 %1006
      %v1009 = vadd.f32 %v999, %v1007
      %v1010 = vtanh.pop %v1009
      %1012 = vrot.lane.b32.xlu0 %v1010, 64
      %v1013 = vpop.permute.xlu0 %1012
      %v1015 = vmul.f32 %v992, %v1013
      %1017 = vrot.lane.b32.xlu0 %v1009, 96
      %v1018 = vpop.permute.xlu0 %1017
      %1020 = vst.msk [vmem:[#allocation4] sm:$0x3] %vm63, %v1018
      %1022 = vrot.lane.b32.xlu0 %v1015, 32
      %v1023 = vpop.permute.xlu0 %1022
      %1025 = vst.msk [vmem:[#allocation3] sm:$0x3] %vm63, %v1023
      %1026 = vst.msk [vmem:[%s134] sm:$0x3] %vm63, %v1023
      %v1027 = vld [vmem:[%s143] sm:$0x3]
      %1028 = vst.msk [vmem:[#allocation5] sm:$0x3] %vm63, %v1027
      %v1029 = vld [vmem:[#allocation3] sm:$0x3]
      %1031 = vrot.lane.b32.xlu0 %v1029, 32
      %v1032 = vpop.permute.xlu0 %1031
      %1034 = vst.msk [vmem:[#allocation5] sm:$0x3] %vm178, %v1032
      %v1035 = vld [vmem:[#allocation5] sm:$0x3]
      %v1037 = vsel %vm181, %v1035, 0
      %1039 = vmatprep.subr.mxu0 0.0
      %1040 = vmatpush1.msra.mxu0 0.0
      %1041 = vmatprep.subr.mxu0 0.0
      %1042 = vmatpush1.msra.mxu0 0.0
      %1043 = vmatprep.subr.mxu0 0.0
      %1044 = vmatpush1.msra.mxu0 0.0
      %1045 = vmatprep.subr.mxu0 0.0
      %1046 = vmatpush1.msra.mxu0 0.0
      %1047 = vmatprep.subr.mxu0 0.0
      %1048 = vmatpush1.msra.mxu0 0.0
      %1049 = vmatprep.subr.mxu0 0.0
      %1050 = vmatpush1.msra.mxu0 0.0
      %1051 = vmatprep.subr.mxu0 0.0
      %1052 = vmatpush1.msra.mxu0 0.0
      %1053 = vmatprep.subr.mxu0 0.0
      %1054 = vmatpush1.msra.mxu0 0.0
      %1055 = vmatprep.subr.mxu0 0.0
      %1056 = vmatpush1.msra.mxu0 %v160
      %1057 = vmatprep.subr.mxu0 0.0
      %1058 = vmatpush1.msra.mxu0 %v159
      %1059 = vmatprep.subr.mxu0 0.0
      %1060 = vmatpush1.msra.mxu0 %v158
      %1061 = vmatprep.subr.mxu0 0.0
      %1062 = vmatpush1.msra.mxu0 %v157
      %1063 = vmatprep.subr.mxu0 0.0
      %1064 = vmatpush1.msra.mxu0 %v156
      %1065 = vmatprep.subr.mxu0 0.0
      %1066 = vmatpush1.msra.mxu0 %v155
      %1067 = vmatprep.subr.mxu0 0.0
      %1068 = vmatpush1.msra.mxu0 %v154
      %1069 = vmatprep.subr.mxu0 0.0
      %1070 = vmatpush1.msra.mxu0 %v153
      %1071 = vmatprep.subr.mxu0 0.0
      %1072 = vmatpush2.msra.mxu0 0.0
      %1073 = vmatprep.subr.mxu0 0.0
      %1074 = vmatpush2.msra.mxu0 0.0
      %1075 = vmatprep.subr.mxu0 0.0
      %1076 = vmatpush2.msra.mxu0 0.0
      %1077 = vmatprep.subr.mxu0 0.0
      %1078 = vmatpush2.msra.mxu0 0.0
      %1079 = vmatprep.subr.mxu0 0.0
      %1080 = vmatpush2.msra.mxu0 0.0
      %1081 = vmatprep.subr.mxu0 0.0
      %1082 = vmatpush2.msra.mxu0 0.0
      %1083 = vmatprep.subr.mxu0 0.0
      %1084 = vmatpush2.msra.mxu0 0.0
      %1085 = vmatprep.subr.mxu0 0.0
      %1086 = vmatpush2.msra.mxu0 0.0
      %1087 = vmatprep.subr.mxu0 0.0
      %1088 = vmatpush2.msra.mxu0 0.0
      %1089 = vmatprep.subr.mxu0 0.0
      %1090 = vmatpush2.msra.mxu0 0.0
      %1091 = vmatprep.subr.mxu0 0.0
      %1092 = vmatpush2.msra.mxu0 0.0
      %1093 = vmatprep.subr.mxu0 0.0
      %1094 = vmatpush2.msra.mxu0 0.0
      %1095 = vmatprep.subr.mxu0 0.0
      %1096 = vmatpush2.msra.mxu0 0.0
      %1097 = vmatprep.subr.mxu0 0.0
      %1098 = vmatpush2.msra.mxu0 0.0
      %1099 = vmatprep.subr.mxu0 0.0
      %1100 = vmatpush2.msra.mxu0 0.0
      %1101 = vmatprep.subr.mxu0 0.0
      %1102 = vmatpush2.msra.mxu0 0.0
      %1103 = vmatprep.mubr.f32.mxu0 0.0
      %1104 = vmatmul.mubr.f32.gmra.mxu0 %v1037
      %v1105 = vpop.f32.mrf.mxu0
      %v1106 = vadd.f32 %v167, %v1105
      %v1107 = vpop.f32.mrf.mxu0
      %1108 = vdwg.mxu0
      %v1109 = vxor.u32 %v1106, 2147483648
      %v1110 = vmul.f32 %v1109, 1.442695
      %v1111 = vpow.pop %v1110
      %v1112 = vadd.f32 %v1111, 1.0
      %v1113 = vrcp.pop %v1112
      %v1114 = vmul.f32 1.0, %v1113
      %v1115 = vtanh.pop %v1106
      %v1116 = vld [vmem:[#allocation4] sm:$0x3]
      %1118 = vrot.lane.b32.xlu0 %v1116, 32
      %v1119 = vpop.permute.xlu0 %1118
      %v1121 = vmul.f32 %v1114, %v1119
      %1123 = vrot.lane.b32.xlu0 %v1115, 64
      %v1124 = vpop.permute.xlu0 %1123
      %v1126 = vmul.f32 %v1114, %v1124
      %1128 = vrot.lane.b32.xlu0 %v1126, 32
      %v1129 = vpop.permute.xlu0 %1128
      %v1131 = vadd.f32 %v1121, %v1129
      %v1132 = vtanh.pop %v1131
      %1134 = vrot.lane.b32.xlu0 %v1132, 64
      %v1135 = vpop.permute.xlu0 %1134
      %v1137 = vmul.f32 %v1114, %v1135
      %1139 = vrot.lane.b32.xlu0 %v1131, 96
      %v1140 = vpop.permute.xlu0 %1139
      %1142 = vst.msk [vmem:[#allocation4] sm:$0x3] %vm63, %v1140
      %1144 = vrot.lane.b32.xlu0 %v1137, 32
      %v1145 = vpop.permute.xlu0 %1144
      %1147 = vst.msk [vmem:[#allocation3] sm:$0x3] %vm63, %v1145
      %1148 = vst.msk [vmem:[%s143] sm:$0x3] %vm63, %v1145
    $region38: #{success_predictor_forward.1} parent=1 // loop_footer
      %s150 = sadd.s32 1, %s146
    $region39: #{success_predictor_forward.1} parent=1 // loop_footer_branch
      %145 = sbr.rel target = $region35
    $region40: #{success_predictor_forward.1} parent=1 // loop_exit
      _
    %v1149 = vld [vmem:[#allocation3] sm:$0x3]
    %v1150 = vld [vmem:[%s3] sm:$0x1]
    %v1152 = vlaneseq
    %v1153 = vshrl.u32 %v1152, 7
    %v1154 = vsub.s32 0, %v1153
    %v1155 = vrot.slane %v1150, %v1154
    %v1157 = vmul.f32 %v1149, %v1155
    %v1158 = vsel %vm63, %v1157, 0.0
    %1159 = vadd.xlane.f32.xlu0 %v1158
    %v1160 = vpop.xlane.xlu0 %1159
    %v1161 = vld [vmem:[#allocation6] sm:$0x1]
    %v1163 = vlaneseq
    %v1164 = vshrl.u32 %v1163, 7
    %v1165 = vsub.s32 0, %v1164
    %v1166 = vrot.slane %v1161, %v1165
    %v1168 = vadd.f32 %v1160, %v1166
    %v1169 = vxor.u32 %v1168, 2147483648
    %v1170 = vmul.f32 %v1169, 1.442695
    %v1171 = vpow.pop %v1170
    %v1172 = vadd.f32 %v1171, 1.0
    %v1173 = vrcp.pop %v1172
    %v1174 = vmul.f32 1.0, %v1173
    %vm1175 = vcmask 1024
    %1176 = vst.msk [vmem:[%s5] sm:$0x3] %vm1175, %v1174
    // Predicated region
    $region41: #{success_predictor_forward.1} parent=1 // pred_check
      _
    $region42: #{success_predictor_forward.1} parent=1 // pred_check_branch
      %1178 = sbr.rel (0) target = $region44
    $region43: #{success_predictor_forward.1} parent=1 // pred_region
      _
    $region44: #{success_predictor_forward.1} parent=1 // pred_fallthru
      _
    // Predicated region
    $region45: #{success_predictor_forward.1} parent=1 // pred_check
      _
    $region46: #{success_predictor_forward.1} parent=1 // pred_check_branch
      %1180 = sbr.rel (0) target = $region48
    $region47: #{success_predictor_forward.1} parent=1 // pred_region
      _
    $region48: #{success_predictor_forward.1} parent=1 // pred_fallthru
      _
    %1181 = vsyncpa [#allocation8], 1
    %1182 = vsyncpa [#allocation10], 1

</llo_original>
